<compile_context>
chip_gen: v6e
topology: v6e:2x2x1
jax: 0.10.0
libtpu: 0.0.40
codegen_flags: <defaults>
</compile_context>

<pallas_src>
import functools

import jax
import jax.numpy as jnp
from jax import lax
from jax.experimental import pallas as pl
from jax.experimental.pallas import tpu as pltpu


# ---------------- hardware-adaptive sizing ----------------

def _round_up(x, m):
    return ((x + m - 1) // m) * m


def _vmem_capacity_bytes():
    try:
        info = pltpu.get_tpu_info()
        for name in ("vmem_capacity_bytes", "vmem_size_bytes", "vmem_bytes"):
            cap = getattr(info, name, None)
            if cap:
                return int(cap)
    except Exception:
        pass
    return 128 * 1024 * 1024


_VMEM_CAP = _vmem_capacity_bytes()
_SMALL_VMEM = _VMEM_CAP <= 80 * 1024 * 1024          # v7x: 64 MiB / TensorCore
_VMEM_LIMIT = (48 if _SMALL_VMEM else 64) * 1024 * 1024

_TILE_M_CAP = 256 if _SMALL_VMEM else 512
_TILE_N_CAP = 256 if _SMALL_VMEM else 512
_TILE_K_CAP = 1024 if _SMALL_VMEM else 2048
_BN_TILE_M_CAP = 512 if _SMALL_VMEM else 1024


# ---------------- Pallas kernel: fused activation + tiled matmul ----------------

def _act_matmul_kernel(p_ref, w_ref, o_ref, acc_ref, *, negative_slope):
    @pl.when(pl.program_id(2) == 0)
    def _():
        acc_ref[...] = jnp.zeros_like(acc_ref)

    p = p_ref[...]
    # act(0) == 0, so zero padding (spatial, channel, M/K padding) is unaffected.
    if negative_slope == 0.0:
        p = jnp.maximum(p, 0.0)
    else:
        p = jnp.where(p > 0, p, p * negative_slope)

    acc_ref[...] += jnp.dot(p, w_ref[...], preferred_element_type=jnp.float32)

    @pl.when(pl.program_id(2) == pl.num_programs(2) - 1)
    def _():
        o_ref[...] = acc_ref[...].astype(o_ref.dtype)


def pallas_act_matmul(p, w, negative_slope, out_dtype=jnp.float32):
    """out = act(p) @ w, tiled over (M, N, K); p/w expected bf16, f32 accumulate."""
    M, K = p.shape
    K2, N = w.shape
    assert K == K2, (p.shape, w.shape)

    tm = min(_round_up(M, 128), _TILE_M_CAP)
    tk = min(_round_up(K, 128), _TILE_K_CAP)
    tn = min(_round_up(N, 128), _TILE_N_CAP)
    Mp, Kp, Np = _round_up(M, tm), _round_up(K, tk), _round_up(N, tn)

    p = jnp.pad(p, ((0, Mp - M), (0, Kp - K)))
    w = jnp.pad(w, ((0, Kp - K), (0, Np - N)))
    grid = (Mp // tm, Np // tn, Kp // tk)

    in_bytes = int((Mp * Kp + Kp * Np) * p.dtype.itemsize)
    out_bytes = int(Mp * Np * jnp.dtype(out_dtype).itemsize)

    out = pl.pallas_call(
        functools.partial(_act_matmul_kernel, negative_slope=negative_slope),
        out_shape=jax.ShapeDtypeStruct((Mp, Np), out_dtype),
        grid_spec=pltpu.PrefetchScalarGridSpec(
            num_scalar_prefetch=0,
            grid=grid,
            in_specs=[pl.BlockSpec((tm, tk), lambda i, j, k: (i, k)),
                      pl.BlockSpec((tk, tn), lambda i, j, k: (k, j))],
            out_specs=pl.BlockSpec((tm, tn), lambda i, j, k: (i, j)),
            scratch_shapes=[pltpu.VMEM((tm, tn), jnp.float32)]),
        compiler_params=pltpu.CompilerParams(
            dimension_semantics=("parallel", "parallel", "arbitrary"),
            vmem_limit_bytes=_VMEM_LIMIT),
        cost_estimate=pl.CostEstimate(
            flops=int(2 * Mp * Np * Kp),
            transcendentals=0,
            bytes_accessed=in_bytes + out_bytes),
    )(p, w)
    return out[:M, :N]


# ---------------- Pallas kernels: tiled BatchNorm (global stats) ----------------

def _bn_stats_kernel(u_ref, out_ref, s_ref, q_ref):
    @pl.when(pl.program_id(0) == 0)
    def _():
        s_ref[...] = jnp.zeros_like(s_ref)
        q_ref[...] = jnp.zeros_like(q_ref)

    u = u_ref[...]
    s_ref[...] += jnp.sum(u, axis=0, keepdims=True)
    q_ref[...] += jnp.sum(u * u, axis=0, keepdims=True)

    @pl.when(pl.program_id(0) == pl.num_programs(0) - 1)
    def _():
        out_ref[0:1, :] = s_ref[...]
        out_ref[1:2, :] = q_ref[...]


def _bn_apply_kernel(u_ref, sums_ref, g_ref, b_ref, o_ref, *, inv_count, eps):
    mean = sums_ref[0:1, :] * inv_count
    var = sums_ref[1:2, :] * inv_count - mean * mean
    scale = g_ref[...] * lax.rsqrt(var + eps)          # EUP rsqrt, per-tile cheap
    shift = b_ref[...] - mean * scale
    o_ref[...] = u_ref[...] * scale + shift


def pallas_batchnorm(u, gamma, beta, count, eps=1e-5):
    """Training-mode BatchNorm over rows of u:(M, C); gamma/beta:(C,)."""
    M, C = u.shape
    tm = min(_round_up(M, 8), _BN_TILE_M_CAP)
    Mp = _round_up(M, tm)
    u_p = jnp.pad(u, ((0, Mp - M), (0, 0)))            # zero rows: sums unaffected
    g = gamma.reshape(1, C).astype(jnp.float32)
    b = beta.reshape(1, C).astype(jnp.float32)
    grid = (Mp // tm,)

    sums = pl.pallas_call(
        _bn_stats_kernel,
        out_shape=jax.ShapeDtypeStruct((2, C), jnp.float32),
        grid_spec=pltpu.PrefetchScalarGridSpec(
            num_scalar_prefetch=0,
            grid=grid,
            in_specs=[pl.BlockSpec((tm, C), lambda i: (i, 0))],
            out_specs=pl.BlockSpec((2, C), lambda i: (0, 0)),
            scratch_shapes=[pltpu.VMEM((1, C), jnp.float32),
                            pltpu.VMEM((1, C), jnp.float32)]),
        compiler_params=pltpu.CompilerParams(
            dimension_semantics=("arbitrary",),
            vmem_limit_bytes=_VMEM_LIMIT),
        cost_estimate=pl.CostEstimate(
            flops=int(3 * Mp * C), transcendentals=0,
            bytes_accessed=int(Mp * C * 4 + 2 * C * 4)),
    )(u_p)

    out = pl.pallas_call(
        functools.partial(_bn_apply_kernel, inv_count=1.0 / float(count), eps=eps),
        out_shape=jax.ShapeDtypeStruct((Mp, C), jnp.float32),
        grid_spec=pltpu.PrefetchScalarGridSpec(
            num_scalar_prefetch=0,
            grid=grid,
            in_specs=[pl.BlockSpec((tm, C), lambda i: (i, 0)),
                      pl.BlockSpec((2, C), lambda i: (0, 0)),
                      pl.BlockSpec((1, C), lambda i: (0, 0)),
                      pl.BlockSpec((1, C), lambda i: (0, 0))],
            out_specs=pl.BlockSpec((tm, C), lambda i: (i, 0))),
        compiler_params=pltpu.CompilerParams(
            dimension_semantics=("parallel",),
            vmem_limit_bytes=_VMEM_LIMIT),
        cost_estimate=pl.CostEstimate(
            flops=int(4 * Mp * C), transcendentals=int(C),
            bytes_accessed=int(2 * Mp * C * 4)),
    )(u_p, sums, g, b)
    return out[:M]


# ---------------- JAX glue: layout, im2col (down conv), col2im (ConvT) ----------------

def im2col(x_nhwc, k, stride, pad):
    x = jnp.pad(x_nhwc, ((0, 0), (pad, pad), (pad, pad), (0, 0)))
    n, hp, wp, c = x.shape
    oh = (hp - k) // stride + 1
    ow = (wp - k) // stride + 1
    taps = []
    for di in range(k):
        for dj in range(k):
            taps.append(x[:, di:di + stride * (oh - 1) + 1:stride,
                             dj:dj + stride * (ow - 1) + 1:stride, :])
    p = jnp.stack(taps, axis=3)                       # (n, oh, ow, k*k, c)
    return p.reshape(n * oh * ow, k * k * c), (n, oh, ow)


def col2im_convT(proj, stride, pad):
    """Overlap-add scatter of per-pixel (kh, kw, cout) projections -> ConvT output."""
    n, ih, iw, kh_, kw_, c = proj.shape
    full_h = (ih - 1) * stride + kh_
    full_w = (iw - 1) * stride + kw_
    full = jnp.zeros((n, full_h, full_w, c), proj.dtype)
    for kh in range(kh_):
        for kw in range(kw_):
            full = full.at[:, kh:kh + stride * (ih - 1) + 1:stride,
                              kw:kw + stride * (iw - 1) + 1:stride, :].add(
                                  proj[:, :, :, kh, kw, :])
    oh = (ih - 1) * stride - 2 * pad + kh_
    ow = (iw - 1) * stride - 2 * pad + kw_
    return full[:, pad:pad + oh, pad:pad + ow, :]


# ---------------- UNetBlock (innermost) forward ----------------

def unet_innermost_forward(x_nchw, w_down, w_up, gamma, beta, eps=1e-5):
    K = 4
    n, cin, h, w = x_nchw.shape
    inner_nc = w_down.shape[0]
    outer_nc = w_up.shape[1]

    cin_p = _round_up(cin, 8)            # 16*cin_p is a multiple of 128 (K dim)
    cinner_p = _round_up(inner_nc, 128)  # lane-dense down output / up-conv K dim
    cout_p = _round_up(outer_nc, 8)      # 16*cout_p is a multiple of 128 (up N dim)

    x_nhwc = jnp.transpose(x_nchw, (0, 2, 3, 1)).astype(jnp.bfloat16)
    x_cpad = jnp.pad(x_nhwc, ((0, 0), (0, 0), (0, 0), (0, cin_p - cin)))

    # --- down: LeakyReLU(0.2) -> Conv2d(cin, inner_nc, k=4, s=2, p=1, bias=False)
    patches, (n0, oh, ow) = im2col(x_cpad, K, stride=2, pad=1)
    w_dn = jnp.transpose(w_down, (2, 3, 1, 0))                 # (kh, kw, cin, cout)
    w_dn = jnp.pad(w_dn, ((0, 0), (0, 0), (0, cin_p - cin), (0, cinner_p - inner_nc)))
    w_dn = w_dn.reshape(K * K * cin_p, cinner_p).astype(jnp.bfloat16)
    d = pallas_act_matmul(patches, w_dn, 0.2, out_dtype=jnp.bfloat16)   # (n*oh*ow, cinner_p)

    # --- up: ReLU -> ConvTranspose2d(inner_nc, outer_nc, k=4, s=2, p=1, bias=False)
    # Dense subpixel projection: out[2*iy-1+kh, 2*ix-1+kw] += relu(d)[iy,ix] @ W[:, :, kh, kw]
    w_upc = jnp.transpose(w_up, (0, 2, 3, 1))                  # (cin_in, kh, kw, cout)
    w_upc = jnp.pad(w_upc, ((0, cinner_p - inner_nc), (0, 0), (0, 0),
                            (0, cout_p - outer_nc)))
    w_upc = w_upc.reshape(cinner_p, K * K * cout_p).astype(jnp.bfloat16)
    proj = pallas_act_matmul(d, w_upc, 0.0, out_dtype=jnp.float32)      # (n*oh*ow, 16*cout_p)
    proj = proj.reshape(n0, oh, ow, K, K, cout_p)
    u_nhwc = col2im_convT(proj, stride=2, pad=1)               # (n, 2*oh, 2*ow, cout_p)

    # --- BatchNorm2d(outer_nc), training-mode biased batch statistics
    uh, uw = 2 * oh, 2 * ow
    c_bn = _round_up(cout_p, 128)                              # lane-dense BN tiles
    u2 = jnp.pad(u_nhwc, ((0, 0), (0, 0), (0, 0), (0, c_bn - cout_p)))
    u2 = u2.reshape(n0 * uh * uw, c_bn)
    g = jnp.pad(gamma.reshape(-1).astype(jnp.float32), (0, c_bn - outer_nc))
    b = jnp.pad(beta.reshape(-1).astype(jnp.float32), (0, c_bn - outer_nc))
    u_bn = pallas_batchnorm(u2, g, b, count=n0 * uh * uw, eps=eps)
    u_bn = u_bn[:, :outer_nc].reshape(n0, uh, uw, outer_nc)
    u_nchw = jnp.transpose(u_bn, (0, 3, 1, 2)).astype(x_nchw.dtype)

    # --- skip connection: torch.cat([x, model(x)], dim=1)
    return jnp.concatenate([x_nchw, u_nchw], axis=1)


# ---------------- pure-JAX reference (f32, lax convolutions) ----------------

def reference(x, w_down, w_up, gamma, beta, eps=1e-5):
    xa = jnp.where(x >= 0, x, 0.2 * x)
    dn = lax.conv_general_dilated(xa, w_down, (2, 2), ((1, 1), (1, 1)),
                                  dimension_numbers=('NCHW', 'OIHW', 'NCHW'))
    dr = jnp.maximum(dn, 0.0)
    w_conv = jnp.flip(jnp.transpose(w_up, (1, 0, 2, 3)), axis=(2, 3))
    up = lax.conv_general_dilated(dr, w_conv, (1, 1), ((2, 2), (2, 2)),
                                  lhs_dilation=(2, 2),
                                  dimension_numbers=('NCHW', 'OIHW', 'NCHW'))
    mean = up.mean(axis=(0, 2, 3), keepdims=True)
    var = ((up - mean) ** 2).mean(axis=(0, 2, 3), keepdims=True)
    ub = ((up - mean) * lax.rsqrt(var + eps) * gamma.reshape(1, -1, 1, 1)
          + beta.reshape(1, -1, 1, 1))
    return jnp.concatenate([x, ub], axis=1)


if __name__ == "__main__":
    key = jax.random.PRNGKey(0)
    k1, k2, k3 = jax.random.split(key, 3)

    N, outer_nc, inner_nc, H, W = 2, 4, 8, 16, 16
    input_nc = outer_nc  # input_nc defaults to outer_nc in the module

    x = jax.random.normal(k1, (N, input_nc, H, W), jnp.float32)
    # Conv2d weight: (inner_nc, input_nc, 4, 4); ConvT weight: (inner_nc, outer_nc, 4, 4)
    w_down = jax.random.normal(k2, (inner_nc, input_nc, 4, 4), jnp.float32) * 0.1
    w_up = jax.random.normal(k3, (inner_nc, outer_nc, 4, 4), jnp.float32) * 0.1
    # BatchNorm2d default init: gamma=1, beta=0
    gamma = jnp.ones((outer_nc,), jnp.float32)
    beta = jnp.zeros((outer_nc,), jnp.float32)

    fwd = jax.jit(unet_innermost_forward)
    out = jax.block_until_ready(fwd(x, w_down, w_up, gamma, beta))
    ref = jax.block_until_ready(reference(x, w_down, w_up, gamma, beta))

    assert out.shape == (N, input_nc + outer_nc, H, W), out.shape
    # bf16 MXU inputs (f32 accumulation) -> loosened tolerance vs f32 reference.
    max_err = float(jnp.max(jnp.abs(out - ref)))
    assert jnp.allclose(out, ref, atol=5e-2, rtol=5e-2), max_err
    print("KERNEL_OK")
</pallas_src>

<mosaic_0001>
module attributes {stable_mosaic.version = 11 : i64} {
  func.func @_act_matmul_kernel(%arg0: i32, %arg1: i32, %arg2: i32, %arg3: memref<128x128xbf16, #tpu.memory_space<vmem>>, %arg4: memref<128x128xbf16, #tpu.memory_space<vmem>>, %arg5: memref<128x128xbf16, #tpu.memory_space<vmem>>, %arg6: memref<128x128xf32, #tpu.memory_space<vmem>>) attributes {dimension_semantics = [#tpu.dimension_semantics<parallel>, #tpu.dimension_semantics<parallel>, #tpu.dimension_semantics<arbitrary>], iteration_bounds = array<i64: 1, 1, 1>, scalar_prefetch = 0 : i64, scratch_operands = 1 : i64, tpu.core_type = #tpu.core_type<tc>, window_params = [{transform_indices = @transform_0, window_bounds = array<i64: 128, 128>}, {transform_indices = @transform_1, window_bounds = array<i64: 128, 128>}, {transform_indices = @transform_2, window_bounds = array<i64: 128, 128>}]} {
    %c0_i32 = arith.constant 0 : i32
    %0 = arith.cmpi eq, %arg2, %c0_i32 : i32
    %1 = arith.extui %0 : i1 to i32
    %c0_i32_0 = arith.constant 0 : i32
    %2 = arith.cmpi ne, %1, %c0_i32_0 : i32
    scf.if %2 {
      %cst_12 = arith.constant 0.000000e+00 : f32
      %17 = vector.broadcast %cst_12 : f32 to vector<128x128xf32>
      %c0_13 = arith.constant 0 : index
      %c0_14 = arith.constant 0 : index
      %18 = vector.load %arg6[%c0_13, %c0_14] : memref<128x128xf32, #tpu.memory_space<vmem>>, vector<128x128xf32>
      tpu.vector_store %arg6[%c0_13, %c0_14], %17 {strides = array<i32>} : memref<128x128xf32, #tpu.memory_space<vmem>>, vector<128x128xf32>,
    } else {
    }
    %c0 = arith.constant 0 : index
    %c0_1 = arith.constant 0 : index
    %3 = vector.load %arg3[%c0, %c0_1] : memref<128x128xbf16, #tpu.memory_space<vmem>>, vector<128x128xbf16>
    %cst = arith.constant 0.000000e+00 : bf16
    %4 = vector.broadcast %cst : bf16 to vector<128x128xbf16>
    %5 = arith.cmpf ogt, %3, %4 : vector<128x128xbf16>
    %cst_2 = arith.constant 2.001950e-01 : bf16
    %6 = vector.broadcast %cst_2 : bf16 to vector<128x128xbf16>
    %7 = arith.mulf %3, %6 : vector<128x128xbf16>
    %8 = arith.select %5, %3, %7 : vector<128x128xi1>, vector<128x128xbf16>
    %c0_3 = arith.constant 0 : index
    %c0_4 = arith.constant 0 : index
    %9 = vector.load %arg6[%c0_3, %c0_4] : memref<128x128xf32, #tpu.memory_space<vmem>>, vector<128x128xf32>
    %c0_5 = arith.constant 0 : index
    %c0_6 = arith.constant 0 : index
    %10 = vector.load %arg4[%c0_5, %c0_6] : memref<128x128xbf16, #tpu.memory_space<vmem>>, vector<128x128xbf16>
    %cst_7 = arith.constant dense<0.000000e+00> : vector<128x128xf32>
    %11 = tpu.matmul %8, %10, %cst_7 {dimension_numbers = #tpu.dot_dimension_numbers<[1], [0], [0], [1], [0, 0, 1, 1], [], []>} : vector<128x128xbf16>, vector<128x128xbf16>, vector<128x128xf32> -> vector<128x128xf32>
    %12 = arith.addf %9, %11 : vector<128x128xf32>
    %c0_8 = arith.constant 0 : index
    %c0_9 = arith.constant 0 : index
    %13 = vector.load %arg6[%c0_8, %c0_9] : memref<128x128xf32, #tpu.memory_space<vmem>>, vector<128x128xf32>
    tpu.vector_store %arg6[%c0_8, %c0_9], %12 {strides = array<i32>} : memref<128x128xf32, #tpu.memory_space<vmem>>, vector<128x128xf32>,
    %c0_i32_10 = arith.constant 0 : i32
    %14 = arith.cmpi eq, %arg2, %c0_i32_10 : i32
    %15 = arith.extui %14 : i1 to i32
    %c0_i32_11 = arith.constant 0 : i32
    %16 = arith.cmpi ne, %15, %c0_i32_11 : i32
    scf.if %16 {
      %c0_12 = arith.constant 0 : index
      %c0_13 = arith.constant 0 : index
      %17 = vector.load %arg6[%c0_12, %c0_13] : memref<128x128xf32, #tpu.memory_space<vmem>>, vector<128x128xf32>
      %18 = arith.truncf %17 : vector<128x128xf32> to vector<128x128xbf16>
      %c0_14 = arith.constant 0 : index
      %c0_15 = arith.constant 0 : index
      %19 = vector.load %arg5[%c0_14, %c0_15] : memref<128x128xbf16, #tpu.memory_space<vmem>>, vector<128x128xbf16>
      tpu.vector_store %arg5[%c0_14, %c0_15], %18 {strides = array<i32>} : memref<128x128xbf16, #tpu.memory_space<vmem>>, vector<128x128xbf16>,
    } else {
    }
    return
  }
  func.func @transform_0(%arg0: i32, %arg1: i32, %arg2: i32) -> (i32, i32) {
    %c0_i32 = arith.constant 0 : i32
    return %arg0, %arg2 : i32, i32
  }
  func.func @transform_1(%arg0: i32, %arg1: i32, %arg2: i32) -> (i32, i32) {
    %c0_i32 = arith.constant 0 : i32
    return %arg2, %arg1 : i32, i32
  }
  func.func @transform_2(%arg0: i32, %arg1: i32, %arg2: i32) -> (i32, i32) {
    %c0_i32 = arith.constant 0 : i32
    return %arg0, %arg1 : i32, i32
  }
}

module attributes {stable_mosaic.version = 11 : i64} {
  func.func @_act_matmul_kernel(%arg0: i32, %arg1: i32, %arg2: i32, %arg3: memref<128x128xbf16, #tpu.memory_space<vmem>>, %arg4: memref<128x128xbf16, #tpu.memory_space<vmem>>, %arg5: memref<128x128xf32, #tpu.memory_space<vmem>>, %arg6: memref<128x128xf32, #tpu.memory_space<vmem>>) attributes {dimension_semantics = [#tpu.dimension_semantics<parallel>, #tpu.dimension_semantics<parallel>, #tpu.dimension_semantics<arbitrary>], iteration_bounds = array<i64: 1, 1, 1>, scalar_prefetch = 0 : i64, scratch_operands = 1 : i64, tpu.core_type = #tpu.core_type<tc>, window_params = [{transform_indices = @transform_0, window_bounds = array<i64: 128, 128>}, {transform_indices = @transform_1, window_bounds = array<i64: 128, 128>}, {transform_indices = @transform_2, window_bounds = array<i64: 128, 128>}]} {
    %c0_i32 = arith.constant 0 : i32
    %0 = arith.cmpi eq, %arg2, %c0_i32 : i32
    %1 = arith.extui %0 : i1 to i32
    %c0_i32_0 = arith.constant 0 : i32
    %2 = arith.cmpi ne, %1, %c0_i32_0 : i32
    scf.if %2 {
      %cst_11 = arith.constant 0.000000e+00 : f32
      %14 = vector.broadcast %cst_11 : f32 to vector<128x128xf32>
      %c0_12 = arith.constant 0 : index
      %c0_13 = arith.constant 0 : index
      %15 = vector.load %arg6[%c0_12, %c0_13] : memref<128x128xf32, #tpu.memory_space<vmem>>, vector<128x128xf32>
      tpu.vector_store %arg6[%c0_12, %c0_13], %14 {strides = array<i32>} : memref<128x128xf32, #tpu.memory_space<vmem>>, vector<128x128xf32>,
    } else {
    }
    %c0 = arith.constant 0 : index
    %c0_1 = arith.constant 0 : index
    %3 = vector.load %arg3[%c0, %c0_1] : memref<128x128xbf16, #tpu.memory_space<vmem>>, vector<128x128xbf16>
    %cst = arith.constant 0.000000e+00 : bf16
    %4 = vector.broadcast %cst : bf16 to vector<128x128xbf16>
    %5 = arith.maximumf %3, %4 : vector<128x128xbf16>
    %c0_2 = arith.constant 0 : index
    %c0_3 = arith.constant 0 : index
    %6 = vector.load %arg6[%c0_2, %c0_3] : memref<128x128xf32, #tpu.memory_space<vmem>>, vector<128x128xf32>
    %c0_4 = arith.constant 0 : index
    %c0_5 = arith.constant 0 : index
    %7 = vector.load %arg4[%c0_4, %c0_5] : memref<128x128xbf16, #tpu.memory_space<vmem>>, vector<128x128xbf16>
    %cst_6 = arith.constant dense<0.000000e+00> : vector<128x128xf32>
    %8 = tpu.matmul %5, %7, %cst_6 {dimension_numbers = #tpu.dot_dimension_numbers<[1], [0], [0], [1], [0, 0, 1, 1], [], []>} : vector<128x128xbf16>, vector<128x128xbf16>, vector<128x128xf32> -> vector<128x128xf32>
    %9 = arith.addf %6, %8 : vector<128x128xf32>
    %c0_7 = arith.constant 0 : index
    %c0_8 = arith.constant 0 : index
    %10 = vector.load %arg6[%c0_7, %c0_8] : memref<128x128xf32, #tpu.memory_space<vmem>>, vector<128x128xf32>
    tpu.vector_store %arg6[%c0_7, %c0_8], %9 {strides = array<i32>} : memref<128x128xf32, #tpu.memory_space<vmem>>, vector<128x128xf32>,
    %c0_i32_9 = arith.constant 0 : i32
    %11 = arith.cmpi eq, %arg2, %c0_i32_9 : i32
    %12 = arith.extui %11 : i1 to i32
    %c0_i32_10 = arith.constant 0 : i32
    %13 = arith.cmpi ne, %12, %c0_i32_10 : i32
    scf.if %13 {
      %c0_11 = arith.constant 0 : index
      %c0_12 = arith.constant 0 : index
      %14 = vector.load %arg6[%c0_11, %c0_12] : memref<128x128xf32, #tpu.memory_space<vmem>>, vector<128x128xf32>
      %c0_13 = arith.constant 0 : index
      %c0_14 = arith.constant 0 : index
      %15 = vector.load %arg5[%c0_13, %c0_14] : memref<128x128xf32, #tpu.memory_space<vmem>>, vector<128x128xf32>
      tpu.vector_store %arg5[%c0_13, %c0_14], %14 {strides = array<i32>} : memref<128x128xf32, #tpu.memory_space<vmem>>, vector<128x128xf32>,
    } else {
    }
    return
  }
  func.func @transform_0(%arg0: i32, %arg1: i32, %arg2: i32) -> (i32, i32) {
    %c0_i32 = arith.constant 0 : i32
    return %arg0, %arg2 : i32, i32
  }
  func.func @transform_1(%arg0: i32, %arg1: i32, %arg2: i32) -> (i32, i32) {
    %c0_i32 = arith.constant 0 : i32
    return %arg2, %arg1 : i32, i32
  }
  func.func @transform_2(%arg0: i32, %arg1: i32, %arg2: i32) -> (i32, i32) {
    %c0_i32 = arith.constant 0 : i32
    return %arg0, %arg1 : i32, i32
  }
}

module attributes {stable_mosaic.version = 11 : i64} {
  func.func @_bn_stats_kernel(%arg0: i32, %arg1: memref<512x128xf32, #tpu.memory_space<vmem>>, %arg2: memref<2x128xf32, #tpu.memory_space<vmem>>, %arg3: memref<1x128xf32, #tpu.memory_space<vmem>>, %arg4: memref<1x128xf32, #tpu.memory_space<vmem>>) attributes {dimension_semantics = [#tpu.dimension_semantics<arbitrary>], iteration_bounds = array<i64: 1>, scalar_prefetch = 0 : i64, scratch_operands = 2 : i64, tpu.core_type = #tpu.core_type<tc>, window_params = [{transform_indices = @transform_0, window_bounds = array<i64: 512, 128>}, {pipeline_mode = #tpu.pipeline_mode<synchronous>, transform_indices = @transform_1, window_bounds = array<i64: 2, 128>}]} {
    %c0_i32 = arith.constant 0 : i32
    %0 = arith.cmpi eq, %arg0, %c0_i32 : i32
    %1 = arith.extui %0 : i1 to i32
    %c0_i32_0 = arith.constant 0 : i32
    %2 = arith.cmpi ne, %1, %c0_i32_0 : i32
    scf.if %2 {
      %cst_13 = arith.constant 0.000000e+00 : f32
      %18 = vector.broadcast %cst_13 : f32 to vector<1x128xf32>
      %c0_14 = arith.constant 0 : index
      %c0_15 = arith.constant 0 : index
      %19 = vector.load %arg3[%c0_14, %c0_15] : memref<1x128xf32, #tpu.memory_space<vmem>>, vector<1x128xf32>
      tpu.vector_store %arg3[%c0_14, %c0_15], %18 {strides = array<i32>} : memref<1x128xf32, #tpu.memory_space<vmem>>, vector<1x128xf32>,
      %cst_16 = arith.constant 0.000000e+00 : f32
      %20 = vector.broadcast %cst_16 : f32 to vector<1x128xf32>
      %c0_17 = arith.constant 0 : index
      %c0_18 = arith.constant 0 : index
      %21 = vector.load %arg4[%c0_17, %c0_18] : memref<1x128xf32, #tpu.memory_space<vmem>>, vector<1x128xf32>
      tpu.vector_store %arg4[%c0_17, %c0_18], %20 {strides = array<i32>} : memref<1x128xf32, #tpu.memory_space<vmem>>, vector<1x128xf32>,
    } else {
    }
    %c0 = arith.constant 0 : index
    %c0_1 = arith.constant 0 : index
    %3 = vector.load %arg1[%c0, %c0_1] : memref<512x128xf32, #tpu.memory_space<vmem>>, vector<512x128xf32>
    %c0_2 = arith.constant 0 : index
    %c0_3 = arith.constant 0 : index
    %4 = vector.load %arg3[%c0_2, %c0_3] : memref<1x128xf32, #tpu.memory_space<vmem>>, vector<1x128xf32>
    %cst = arith.constant dense<0.000000e+00> : vector<128xf32>
    %5 = vector.multi_reduction <add>, %3, %cst [0] : vector<512x128xf32> to vector<128xf32>
    %6 = vector.shape_cast %5 : vector<128xf32> to vector<1x128xf32>
    %7 = arith.addf %4, %6 : vector<1x128xf32>
    %c0_4 = arith.constant 0 : index
    %c0_5 = arith.constant 0 : index
    %8 = vector.load %arg3[%c0_4, %c0_5] : memref<1x128xf32, #tpu.memory_space<vmem>>, vector<1x128xf32>
    tpu.vector_store %arg3[%c0_4, %c0_5], %7 {strides = array<i32>} : memref<1x128xf32, #tpu.memory_space<vmem>>, vector<1x128xf32>,
    %c0_6 = arith.constant 0 : index
    %c0_7 = arith.constant 0 : index
    %9 = vector.load %arg4[%c0_6, %c0_7] : memref<1x128xf32, #tpu.memory_space<vmem>>, vector<1x128xf32>
    %10 = arith.mulf %3, %3 : vector<512x128xf32>
    %cst_8 = arith.constant dense<0.000000e+00> : vector<128xf32>
    %11 = vector.multi_reduction <add>, %10, %cst_8 [0] : vector<512x128xf32> to vector<128xf32>
    %12 = vector.shape_cast %11 : vector<128xf32> to vector<1x128xf32>
    %13 = arith.addf %9, %12 : vector<1x128xf32>
    %c0_9 = arith.constant 0 : index
    %c0_10 = arith.constant 0 : index
    %14 = vector.load %arg4[%c0_9, %c0_10] : memref<1x128xf32, #tpu.memory_space<vmem>>, vector<1x128xf32>
    tpu.vector_store %arg4[%c0_9, %c0_10], %13 {strides = array<i32>} : memref<1x128xf32, #tpu.memory_space<vmem>>, vector<1x128xf32>,
    %c0_i32_11 = arith.constant 0 : i32
    %15 = arith.cmpi eq, %arg0, %c0_i32_11 : i32
    %16 = arith.extui %15 : i1 to i32
    %c0_i32_12 = arith.constant 0 : i32
    %17 = arith.cmpi ne, %16, %c0_i32_12 : i32
    scf.if %17 {
      %c0_13 = arith.constant 0 : index
      %c0_14 = arith.constant 0 : index
      %18 = vector.load %arg3[%c0_13, %c0_14] : memref<1x128xf32, #tpu.memory_space<vmem>>, vector<1x128xf32>
      %c0_15 = arith.constant 0 : index
      %c0_16 = arith.constant 0 : index
      %19 = vector.load %arg2[%c0_15, %c0_16] : memref<2x128xf32, #tpu.memory_space<vmem>>, vector<1x128xf32>
      tpu.vector_store %arg2[%c0_15, %c0_16], %18 {strides = array<i32>} : memref<2x128xf32, #tpu.memory_space<vmem>>, vector<1x128xf32>,
      %c0_17 = arith.constant 0 : index
      %c0_18 = arith.constant 0 : index
      %20 = vector.load %arg4[%c0_17, %c0_18] : memref<1x128xf32, #tpu.memory_space<vmem>>, vector<1x128xf32>
      %c1 = arith.constant 1 : index
      %c0_19 = arith.constant 0 : index
      %21 = vector.load %arg2[%c1, %c0_19] : memref<2x128xf32, #tpu.memory_space<vmem>>, vector<1x128xf32>
      tpu.vector_store %arg2[%c1, %c0_19], %20 {strides = array<i32>} : memref<2x128xf32, #tpu.memory_space<vmem>>, vector<1x128xf32>,
    } else {
    }
    return
  }
  func.func @transform_0(%arg0: i32) -> (i32, i32) {
    %c0_i32 = arith.constant 0 : i32
    %c0_i32_0 = arith.constant 0 : i32
    return %arg0, %c0_i32 : i32, i32
  }
  func.func @transform_1(%arg0: i32) -> (i32, i32) {
    %c0_i32 = arith.constant 0 : i32
    %c0_i32_0 = arith.constant 0 : i32
    %c0_i32_1 = arith.constant 0 : i32
    return %c0_i32, %c0_i32_0 : i32, i32
  }
}

module attributes {stable_mosaic.version = 11 : i64} {
  func.func @_bn_apply_kernel(%arg0: i32, %arg1: memref<512x128xf32, #tpu.memory_space<vmem>>, %arg2: memref<2x128xf32, #tpu.memory_space<vmem>>, %arg3: memref<1x128xf32, #tpu.memory_space<vmem>>, %arg4: memref<1x128xf32, #tpu.memory_space<vmem>>, %arg5: memref<512x128xf32, #tpu.memory_space<vmem>>) attributes {dimension_semantics = [#tpu.dimension_semantics<parallel>], iteration_bounds = array<i64: 1>, scalar_prefetch = 0 : i64, scratch_operands = 0 : i64, tpu.core_type = #tpu.core_type<tc>, window_params = [{transform_indices = @transform_0, window_bounds = array<i64: 512, 128>}, {pipeline_mode = #tpu.pipeline_mode<synchronous>, transform_indices = @transform_1, window_bounds = array<i64: 2, 128>}, {pipeline_mode = #tpu.pipeline_mode<synchronous>, transform_indices = @transform_2, window_bounds = array<i64: 1, 128>}, {pipeline_mode = #tpu.pipeline_mode<synchronous>, transform_indices = @transform_3, window_bounds = array<i64: 1, 128>}, {transform_indices = @transform_4, window_bounds = array<i64: 512, 128>}]} {
    %c0 = arith.constant 0 : index
    %c0_0 = arith.constant 0 : index
    %0 = vector.load %arg2[%c0, %c0_0] : memref<2x128xf32, #tpu.memory_space<vmem>>, vector<1x128xf32>
    %cst = arith.constant 0.001953125 : f32
    %1 = vector.broadcast %cst : f32 to vector<1x128xf32>
    %2 = arith.mulf %0, %1 : vector<1x128xf32>
    %c1 = arith.constant 1 : index
    %c0_1 = arith.constant 0 : index
    %3 = vector.load %arg2[%c1, %c0_1] : memref<2x128xf32, #tpu.memory_space<vmem>>, vector<1x128xf32>
    %cst_2 = arith.constant 0.001953125 : f32
    %4 = vector.broadcast %cst_2 : f32 to vector<1x128xf32>
    %5 = arith.mulf %3, %4 : vector<1x128xf32>
    %6 = arith.mulf %2, %2 : vector<1x128xf32>
    %7 = arith.subf %5, %6 : vector<1x128xf32>
    %c0_3 = arith.constant 0 : index
    %c0_4 = arith.constant 0 : index
    %8 = vector.load %arg3[%c0_3, %c0_4] : memref<1x128xf32, #tpu.memory_space<vmem>>, vector<1x128xf32>
    %cst_5 = arith.constant 9.99999974E-6 : f32
    %9 = vector.broadcast %cst_5 : f32 to vector<1x128xf32>
    %10 = arith.addf %7, %9 : vector<1x128xf32>
    %11 = math.rsqrt %10 : vector<1x128xf32>
    %12 = arith.mulf %8, %11 : vector<1x128xf32>
    %c0_6 = arith.constant 0 : index
    %c0_7 = arith.constant 0 : index
    %13 = vector.load %arg4[%c0_6, %c0_7] : memref<1x128xf32, #tpu.memory_space<vmem>>, vector<1x128xf32>
    %14 = arith.mulf %2, %12 : vector<1x128xf32>
    %15 = arith.subf %13, %14 : vector<1x128xf32>
    %c0_8 = arith.constant 0 : index
    %c0_9 = arith.constant 0 : index
    %16 = vector.load %arg1[%c0_8, %c0_9] : memref<512x128xf32, #tpu.memory_space<vmem>>, vector<512x128xf32>
    %17 = vector.broadcast %12 : vector<1x128xf32> to vector<512x128xf32>
    %18 = arith.mulf %16, %17 : vector<512x128xf32>
    %19 = vector.broadcast %15 : vector<1x128xf32> to vector<512x128xf32>
    %20 = arith.addf %18, %19 : vector<512x128xf32>
    %c0_10 = arith.constant 0 : index
    %c0_11 = arith.constant 0 : index
    %21 = vector.load %arg5[%c0_10, %c0_11] : memref<512x128xf32, #tpu.memory_space<vmem>>, vector<512x128xf32>
    tpu.vector_store %arg5[%c0_10, %c0_11], %20 {strides = array<i32>} : memref<512x128xf32, #tpu.memory_space<vmem>>, vector<512x128xf32>,
    return
  }
  func.func @transform_0(%arg0: i32) -> (i32, i32) {
    %c0_i32 = arith.constant 0 : i32
    %c0_i32_0 = arith.constant 0 : i32
    return %arg0, %c0_i32 : i32, i32
  }
  func.func @transform_1(%arg0: i32) -> (i32, i32) {
    %c0_i32 = arith.constant 0 : i32
    %c0_i32_0 = arith.constant 0 : i32
    %c0_i32_1 = arith.constant 0 : i32
    return %c0_i32, %c0_i32_0 : i32, i32
  }
  func.func @transform_2(%arg0: i32) -> (i32, i32) {
    %c0_i32 = arith.constant 0 : i32
    %c0_i32_0 = arith.constant 0 : i32
    %c0_i32_1 = arith.constant 0 : i32
    return %c0_i32, %c0_i32_0 : i32, i32
  }
  func.func @transform_3(%arg0: i32) -> (i32, i32) {
    %c0_i32 = arith.constant 0 : i32
    %c0_i32_0 = arith.constant 0 : i32
    %c0_i32_1 = arith.constant 0 : i32
    return %c0_i32, %c0_i32_0 : i32, i32
  }
  func.func @transform_4(%arg0: i32) -> (i32, i32) {
    %c0_i32 = arith.constant 0 : i32
    %c0_i32_0 = arith.constant 0 : i32
    return %arg0, %c0_i32 : i32, i32
  }
}

</mosaic_0001>

<llo_original>
// kernel: unet_innermost_forward.4
$region0: #{unet_innermost_forward.4}
  #allocation0 [shape = 'u32[]', space=smem, size = 0x4, offset = 0x4, fixed_abs, tag = 'smem constant byte address 0x4 - core index']
  #allocation1 [shape = 'u32[144,128]{1,0:T(1,128)}', space=vmem, size = 0x12000, scoped, tag = 'internal scratch']
  #allocation2 [shape = 'f32[128,128]{1,0:T(8,128)}', space=vmem, size = 0x10000, scoped, tag = 'scratch operand']
  %s0 = inlined_call_operand.vmem [shape: bf16[128,128], index: 0, kind: input, shape index: {}]
  %s1 = inlined_call_operand.vmem [shape: bf16[128,128], index: 1, kind: input, shape index: {}]
  %s2 = inlined_call_operand.vmem [shape: bf16[128,128], index: 2, kind: output, shape index: {}]
  %s3 = sld [smem:[#allocation0]]
  $region26: #{unet_innermost_forward.4} parent=0
    _
  %s5 = ssub.s32 1, %s3
  %s6 = scalar_select 0, %s5, %s3
  // Predicated region
  $region2: #{unet_innermost_forward.4} parent=0 // pred_check
    _
  $region3: #{unet_innermost_forward.4} parent=0 // pred_check_branch
    %8 = sbr.rel (0) target = $region5
  $region4: #{unet_innermost_forward.4} parent=0 // pred_region
    _
  $region5: #{unet_innermost_forward.4} parent=0 // pred_fallthru
    _
  // Predicated region
  $region6: #{unet_innermost_forward.4} parent=0 // pred_check
    _
  $region7: #{unet_innermost_forward.4} parent=0 // pred_check_branch
    %10 = sbr.rel (0) target = $region9
  $region8: #{unet_innermost_forward.4} parent=0 // pred_region
    _
  $region9: #{unet_innermost_forward.4} parent=0 // pred_fallthru
    _
  %p13 = scmp.eq.s32.totalorder 0, 0
  // Predicated region
  $region10: #{unet_innermost_forward.4} parent=0 // pred_check
    %p14 = pneg %p13
  $region11: #{unet_innermost_forward.4} parent=0 // pred_check_branch
    %16 = sbr.rel (%p14) target = $region13
  $region12: #{unet_innermost_forward.4} parent=0 // pred_region
    %17 = vst [vmem:[#allocation2] sm:$0xff] 0.0
    %18 = vst [vmem:[#allocation2 + $0x8] sm:$0xff] 0.0
    %19 = vst [vmem:[#allocation2 + $0x10] sm:$0xff] 0.0
    %20 = vst [vmem:[#allocation2 + $0x18] sm:$0xff] 0.0
    %21 = vst [vmem:[#allocation2 + $0x20] sm:$0xff] 0.0
    %22 = vst [vmem:[#allocation2 + $0x28] sm:$0xff] 0.0
    %23 = vst [vmem:[#allocation2 + $0x30] sm:$0xff] 0.0
    %24 = vst [vmem:[#allocation2 + $0x38] sm:$0xff] 0.0
    %25 = vst [vmem:[#allocation2 + $0x40] sm:$0xff] 0.0
    %26 = vst [vmem:[#allocation2 + $0x48] sm:$0xff] 0.0
    %27 = vst [vmem:[#allocation2 + $0x50] sm:$0xff] 0.0
    %28 = vst [vmem:[#allocation2 + $0x58] sm:$0xff] 0.0
    %29 = vst [vmem:[#allocation2 + $0x60] sm:$0xff] 0.0
    %30 = vst [vmem:[#allocation2 + $0x68] sm:$0xff] 0.0
    %31 = vst [vmem:[#allocation2 + $0x70] sm:$0xff] 0.0
    %32 = vst [vmem:[#allocation2 + $0x78] sm:$0xff] 0.0
  $region13: #{unet_innermost_forward.4} parent=0 // pred_fallthru
    _
  %v33 = vld [vmem:[%s0] sm:$0xf]
  %v34 = vld [vmem:[%s0 + $0x4] sm:$0xf]
  %v35 = vld [vmem:[%s0 + $0x8] sm:$0xf]
  %v36 = vld [vmem:[%s0 + $0xc] sm:$0xf]
  %v37 = vld [vmem:[%s0 + $0x10] sm:$0xf]
  %v38 = vld [vmem:[%s0 + $0x14] sm:$0xf]
  %v39 = vld [vmem:[%s0 + $0x18] sm:$0xf]
  %v40 = vld [vmem:[%s0 + $0x1c] sm:$0xf]
  %v41 = vld [vmem:[%s0 + $0x20] sm:$0xf]
  %v42 = vld [vmem:[%s0 + $0x24] sm:$0xf]
  %v43 = vld [vmem:[%s0 + $0x28] sm:$0xf]
  %v44 = vld [vmem:[%s0 + $0x2c] sm:$0xf]
  %v45 = vld [vmem:[%s0 + $0x30] sm:$0xf]
  %v46 = vld [vmem:[%s0 + $0x34] sm:$0xf]
  %v47 = vld [vmem:[%s0 + $0x38] sm:$0xf]
  %v48 = vld [vmem:[%s0 + $0x3c] sm:$0xf]
  %vm49 = vcmp.gt.bf16.partialorder %v33, 0
  %vm50 = vcmp.gt.bf16.partialorder %v34, 0
  %vm51 = vcmp.gt.bf16.partialorder %v35, 0
  %vm52 = vcmp.gt.bf16.partialorder %v36, 0
  %vm53 = vcmp.gt.bf16.partialorder %v37, 0
  %vm54 = vcmp.gt.bf16.partialorder %v38, 0
  %vm55 = vcmp.gt.bf16.partialorder %v39, 0
  %vm56 = vcmp.gt.bf16.partialorder %v40, 0
  %vm57 = vcmp.gt.bf16.partialorder %v41, 0
  %vm58 = vcmp.gt.bf16.partialorder %v42, 0
  %vm59 = vcmp.gt.bf16.partialorder %v43, 0
  %vm60 = vcmp.gt.bf16.partialorder %v44, 0
  %vm61 = vcmp.gt.bf16.partialorder %v45, 0
  %vm62 = vcmp.gt.bf16.partialorder %v46, 0
  %vm63 = vcmp.gt.bf16.partialorder %v47, 0
  %vm64 = vcmp.gt.bf16.partialorder %v48, 0
  %v65 = vmul.bf16 %v33, 1045249613
  %v66 = vmul.bf16 %v34, 1045249613
  %v67 = vmul.bf16 %v35, 1045249613
  %v68 = vmul.bf16 %v36, 1045249613
  %v69 = vmul.bf16 %v37, 1045249613
  %v70 = vmul.bf16 %v38, 1045249613
  %v71 = vmul.bf16 %v39, 1045249613
  %v72 = vmul.bf16 %v40, 1045249613
  %v73 = vmul.bf16 %v41, 1045249613
  %v74 = vmul.bf16 %v42, 1045249613
  %v75 = vmul.bf16 %v43, 1045249613
  %v76 = vmul.bf16 %v44, 1045249613
  %v77 = vmul.bf16 %v45, 1045249613
  %v78 = vmul.bf16 %v46, 1045249613
  %v79 = vmul.bf16 %v47, 1045249613
  %v80 = vmul.bf16 %v48, 1045249613
  %v81 = vsel %vm49, %v33, %v65
  %v82 = vsel %vm50, %v34, %v66
  %v83 = vsel %vm51, %v35, %v67
  %v84 = vsel %vm52, %v36, %v68
  %v85 = vsel %vm53, %v37, %v69
  %v86 = vsel %vm54, %v38, %v70
  %v87 = vsel %vm55, %v39, %v71
  %v88 = vsel %vm56, %v40, %v72
  %v89 = vsel %vm57, %v41, %v73
  %v90 = vsel %vm58, %v42, %v74
  %v91 = vsel %vm59, %v43, %v75
  %v92 = vsel %vm60, %v44, %v76
  %v93 = vsel %vm61, %v45, %v77
  %v94 = vsel %vm62, %v46, %v78
  %v95 = vsel %vm63, %v47, %v79
  %v96 = vsel %vm64, %v48, %v80
  %v97 = vld [vmem:[#allocation2] sm:$0xff]
  %v98 = vld [vmem:[#allocation2 + $0x8] sm:$0xff]
  %v99 = vld [vmem:[#allocation2 + $0x10] sm:$0xff]
  %v100 = vld [vmem:[#allocation2 + $0x18] sm:$0xff]
  %v101 = vld [vmem:[#allocation2 + $0x20] sm:$0xff]
  %v102 = vld [vmem:[#allocation2 + $0x28] sm:$0xff]
  %v103 = vld [vmem:[#allocation2 + $0x30] sm:$0xff]
  %v104 = vld [vmem:[#allocation2 + $0x38] sm:$0xff]
  %v105 = vld [vmem:[#allocation2 + $0x40] sm:$0xff]
  %v106 = vld [vmem:[#allocation2 + $0x48] sm:$0xff]
  %v107 = vld [vmem:[#allocation2 + $0x50] sm:$0xff]
  %v108 = vld [vmem:[#allocation2 + $0x58] sm:$0xff]
  %v109 = vld [vmem:[#allocation2 + $0x60] sm:$0xff]
  %v110 = vld [vmem:[#allocation2 + $0x68] sm:$0xff]
  %v111 = vld [vmem:[#allocation2 + $0x70] sm:$0xff]
  %v112 = vld [vmem:[#allocation2 + $0x78] sm:$0xff]
  %v113 = vld [vmem:[%s1] sm:$0xf]
  %v114 = vld [vmem:[%s1 + $0x4] sm:$0xf]
  %v115 = vld [vmem:[%s1 + $0x8] sm:$0xf]
  %v116 = vld [vmem:[%s1 + $0xc] sm:$0xf]
  %v117 = vld [vmem:[%s1 + $0x10] sm:$0xf]
  %v118 = vld [vmem:[%s1 + $0x14] sm:$0xf]
  %v119 = vld [vmem:[%s1 + $0x18] sm:$0xf]
  %v120 = vld [vmem:[%s1 + $0x1c] sm:$0xf]
  %v121 = vld [vmem:[%s1 + $0x20] sm:$0xf]
  %v122 = vld [vmem:[%s1 + $0x24] sm:$0xf]
  %v123 = vld [vmem:[%s1 + $0x28] sm:$0xf]
  %v124 = vld [vmem:[%s1 + $0x2c] sm:$0xf]
  %v125 = vld [vmem:[%s1 + $0x30] sm:$0xf]
  %v126 = vld [vmem:[%s1 + $0x34] sm:$0xf]
  %v127 = vld [vmem:[%s1 + $0x38] sm:$0xf]
  %v128 = vld [vmem:[%s1 + $0x3c] sm:$0xf]
  %v145 = vunpack.c.l.b16 %v81
  %v146 = vunpack.c.l.b16 %v82
  %v147 = vunpack.c.l.b16 %v83
  %v148 = vunpack.c.l.b16 %v84
  %v149 = vunpack.c.l.b16 %v85
  %v150 = vunpack.c.l.b16 %v86
  %v151 = vunpack.c.l.b16 %v87
  %v152 = vunpack.c.l.b16 %v88
  %v153 = vunpack.c.l.b16 %v89
  %v154 = vunpack.c.l.b16 %v90
  %v155 = vunpack.c.l.b16 %v91
  %v156 = vunpack.c.l.b16 %v92
  %v157 = vunpack.c.l.b16 %v93
  %v158 = vunpack.c.l.b16 %v94
  %v159 = vunpack.c.l.b16 %v95
  %v160 = vunpack.c.l.b16 %v96
  %v161 = vpack.c.b16 %v146, %v145
  %v162 = vpack.c.b16 %v148, %v147
  %v163 = vpack.c.b16 %v150, %v149
  %v164 = vpack.c.b16 %v152, %v151
  %v165 = vpack.c.b16 %v154, %v153
  %v166 = vpack.c.b16 %v156, %v155
  %v167 = vpack.c.b16 %v158, %v157
  %v168 = vpack.c.b16 %v160, %v159
  %v193 = vunpack.c.l.b16 %v113
  %v194 = vunpack.c.l.b16 %v114
  %v195 = vunpack.c.l.b16 %v115
  %v196 = vunpack.c.l.b16 %v116
  %v197 = vunpack.c.l.b16 %v117
  %v198 = vunpack.c.l.b16 %v118
  %v199 = vunpack.c.l.b16 %v119
  %v200 = vunpack.c.l.b16 %v120
  %v201 = vunpack.c.l.b16 %v121
  %v202 = vunpack.c.l.b16 %v122
  %v203 = vunpack.c.l.b16 %v123
  %v204 = vunpack.c.l.b16 %v124
  %v205 = vunpack.c.l.b16 %v125
  %v206 = vunpack.c.l.b16 %v126
  %v207 = vunpack.c.l.b16 %v127
  %v208 = vunpack.c.l.b16 %v128
  %v209 = vpack.c.b16 %v194, %v193
  %v210 = vpack.c.b16 %v196, %v195
  %v211 = vpack.c.b16 %v198, %v197
  %v212 = vpack.c.b16 %v200, %v199
  %v213 = vpack.c.b16 %v202, %v201
  %v214 = vpack.c.b16 %v204, %v203
  %v215 = vpack.c.b16 %v206, %v205
  %v216 = vpack.c.b16 %v208, %v207
  %225 = vmatprep.subr.bf16.mxu0 0
  %226 = vmatpush1.bf16.msra.mxu0 %v216
  %227 = vmatprep.subr.bf16.mxu0 0
  %228 = vmatpush1.bf16.msra.mxu0 %v215
  %229 = vmatprep.subr.bf16.mxu0 0
  %230 = vmatpush1.bf16.msra.mxu0 %v214
  %231 = vmatprep.subr.bf16.mxu0 0
  %232 = vmatpush1.bf16.msra.mxu0 %v213
  %233 = vmatprep.subr.bf16.mxu0 0
  %234 = vmatpush1.bf16.msra.mxu0 %v212
  %235 = vmatprep.subr.bf16.mxu0 0
  %236 = vmatpush1.bf16.msra.mxu0 %v211
  %237 = vmatprep.subr.bf16.mxu0 0
  %238 = vmatpush1.bf16.msra.mxu0 %v210
  %239 = vmatprep.subr.bf16.mxu0 0
  %240 = vmatpush1.bf16.msra.mxu0 %v209
  %241 = vmatprep.subr.bf16.mxu0 0
  %242 = vmatpush2.bf16.msra.mxu0 0
  %243 = vmatprep.subr.bf16.mxu0 0
  %244 = vmatpush2.bf16.msra.mxu0 0
  %245 = vmatprep.subr.bf16.mxu0 0
  %246 = vmatpush2.bf16.msra.mxu0 0
  %247 = vmatprep.subr.bf16.mxu0 0
  %248 = vmatpush2.bf16.msra.mxu0 0
  %249 = vmatprep.subr.bf16.mxu0 0
  %250 = vmatpush2.bf16.msra.mxu0 0
  %251 = vmatprep.subr.bf16.mxu0 0
  %252 = vmatpush2.bf16.msra.mxu0 0
  %253 = vmatprep.subr.bf16.mxu0 0
  %254 = vmatpush2.bf16.msra.mxu0 0
  %255 = vmatprep.subr.bf16.mxu0 0
  %256 = vmatpush2.bf16.msra.mxu0 0
  %257 = vmatprep.mubr.bf16.mxu0 0
  %258 = vmatmul.mubr.bf16.gmra.mxu0 %v161
  %v259 = vpop.f32.mrf.mxu0
  %v260 = vadd.f32 0.0, %v259
  %v261 = vpop.f32.mrf.mxu0
  %v262 = vpop.f32.mrf.mxu0
  %v263 = vadd.f32 0.0, %v262
  %v264 = vpop.f32.mrf.mxu0
  %265 = vmatprep.mubr.bf16.mxu0 0
  %266 = vmatmul.mubr.bf16.gmra.mxu0 %v162
  %v267 = vpop.f32.mrf.mxu0
  %v268 = vadd.f32 0.0, %v267
  %v269 = vpop.f32.mrf.mxu0
  %v270 = vpop.f32.mrf.mxu0
  %v271 = vadd.f32 0.0, %v270
  %v272 = vpop.f32.mrf.mxu0
  %273 = vmatprep.mubr.bf16.mxu0 0
  %274 = vmatmul.mubr.bf16.gmra.mxu0 %v163
  %v275 = vpop.f32.mrf.mxu0
  %v276 = vadd.f32 0.0, %v275
  %v277 = vpop.f32.mrf.mxu0
  %v278 = vpop.f32.mrf.mxu0
  %v279 = vadd.f32 0.0, %v278
  %v280 = vpop.f32.mrf.mxu0
  %281 = vmatprep.mubr.bf16.mxu0 0
  %282 = vmatmul.mubr.bf16.gmra.mxu0 %v164
  %v283 = vpop.f32.mrf.mxu0
  %v284 = vadd.f32 0.0, %v283
  %v285 = vpop.f32.mrf.mxu0
  %v286 = vpop.f32.mrf.mxu0
  %v287 = vadd.f32 0.0, %v286
  %v288 = vpop.f32.mrf.mxu0
  %289 = vmatprep.mubr.bf16.mxu0 0
  %290 = vmatmul.mubr.bf16.gmra.mxu0 %v165
  %v291 = vpop.f32.mrf.mxu0
  %v292 = vadd.f32 0.0, %v291
  %v293 = vpop.f32.mrf.mxu0
  %v294 = vpop.f32.mrf.mxu0
  %v295 = vadd.f32 0.0, %v294
  %v296 = vpop.f32.mrf.mxu0
  %297 = vmatprep.mubr.bf16.mxu0 0
  %298 = vmatmul.mubr.bf16.gmra.mxu0 %v166
  %v299 = vpop.f32.mrf.mxu0
  %v300 = vadd.f32 0.0, %v299
  %v301 = vpop.f32.mrf.mxu0
  %v302 = vpop.f32.mrf.mxu0
  %v303 = vadd.f32 0.0, %v302
  %v304 = vpop.f32.mrf.mxu0
  %305 = vmatprep.mubr.bf16.mxu0 0
  %306 = vmatmul.mubr.bf16.gmra.mxu0 %v167
  %v307 = vpop.f32.mrf.mxu0
  %v308 = vadd.f32 0.0, %v307
  %v309 = vpop.f32.mrf.mxu0
  %v310 = vpop.f32.mrf.mxu0
  %v311 = vadd.f32 0.0, %v310
  %v312 = vpop.f32.mrf.mxu0
  %313 = vmatprep.mubr.bf16.mxu0 0
  %314 = vmatmul.mubr.bf16.gmra.mxu0 %v168
  %v315 = vpop.f32.mrf.mxu0
  %v316 = vadd.f32 0.0, %v315
  %v317 = vpop.f32.mrf.mxu0
  %v318 = vpop.f32.mrf.mxu0
  %v319 = vadd.f32 0.0, %v318
  %v320 = vpop.f32.mrf.mxu0
  %321 = vdwg.mxu0
  %v322 = vadd.f32 %v97, %v260
  %v323 = vadd.f32 %v98, %v263
  %v324 = vadd.f32 %v99, %v268
  %v325 = vadd.f32 %v100, %v271
  %v326 = vadd.f32 %v101, %v276
  %v327 = vadd.f32 %v102, %v279
  %v328 = vadd.f32 %v103, %v284
  %v329 = vadd.f32 %v104, %v287
  %v330 = vadd.f32 %v105, %v292
  %v331 = vadd.f32 %v106, %v295
  %v332 = vadd.f32 %v107, %v300
  %v333 = vadd.f32 %v108, %v303
  %v334 = vadd.f32 %v109, %v308
  %v335 = vadd.f32 %v110, %v311
  %v336 = vadd.f32 %v111, %v316
  %v337 = vadd.f32 %v112, %v319
  %338 = vst [vmem:[#allocation2] sm:$0xff] %v322
  %339 = vst [vmem:[#allocation2 + $0x8] sm:$0xff] %v323
  %340 = vst [vmem:[#allocation2 + $0x10] sm:$0xff] %v324
  %341 = vst [vmem:[#allocation2 + $0x18] sm:$0xff] %v325
  %342 = vst [vmem:[#allocation2 + $0x20] sm:$0xff] %v326
  %343 = vst [vmem:[#allocation2 + $0x28] sm:$0xff] %v327
  %344 = vst [vmem:[#allocation2 + $0x30] sm:$0xff] %v328
  %345 = vst [vmem:[#allocation2 + $0x38] sm:$0xff] %v329
  %346 = vst [vmem:[#allocation2 + $0x40] sm:$0xff] %v330
  %347 = vst [vmem:[#allocation2 + $0x48] sm:$0xff] %v331
  %348 = vst [vmem:[#allocation2 + $0x50] sm:$0xff] %v332
  %349 = vst [vmem:[#allocation2 + $0x58] sm:$0xff] %v333
  %350 = vst [vmem:[#allocation2 + $0x60] sm:$0xff] %v334
  %351 = vst [vmem:[#allocation2 + $0x68] sm:$0xff] %v335
  %352 = vst [vmem:[#allocation2 + $0x70] sm:$0xff] %v336
  %353 = vst [vmem:[#allocation2 + $0x78] sm:$0xff] %v337
  // Predicated region
  $region14: #{unet_innermost_forward.4} parent=0 // pred_check
    %p354 = pneg %p13
  $region15: #{unet_innermost_forward.4} parent=0 // pred_check_branch
    %356 = sbr.rel (%p354) target = $region17
  $region16: #{unet_innermost_forward.4} parent=0 // pred_region
    %v357 = vld [vmem:[#allocation2] sm:$0xff]
    %v358 = vld [vmem:[#allocation2 + $0x8] sm:$0xff]
    %v359 = vld [vmem:[#allocation2 + $0x10] sm:$0xff]
    %v360 = vld [vmem:[#allocation2 + $0x18] sm:$0xff]
    %v361 = vld [vmem:[#allocation2 + $0x20] sm:$0xff]
    %v362 = vld [vmem:[#allocation2 + $0x28] sm:$0xff]
    %v363 = vld [vmem:[#allocation2 + $0x30] sm:$0xff]
    %v364 = vld [vmem:[#allocation2 + $0x38] sm:$0xff]
    %v365 = vld [vmem:[#allocation2 + $0x40] sm:$0xff]
    %v366 = vld [vmem:[#allocation2 + $0x48] sm:$0xff]
    %v367 = vld [vmem:[#allocation2 + $0x50] sm:$0xff]
    %v368 = vld [vmem:[#allocation2 + $0x58] sm:$0xff]
    %v369 = vld [vmem:[#allocation2 + $0x60] sm:$0xff]
    %v370 = vld [vmem:[#allocation2 + $0x68] sm:$0xff]
    %v371 = vld [vmem:[#allocation2 + $0x70] sm:$0xff]
    %v372 = vld [vmem:[#allocation2 + $0x78] sm:$0xff]
    %v373 = vpack.c.bf16 %v358, %v357
    %v374 = vpack.c.bf16 %v360, %v359
    %v375 = vpack.c.bf16 %v362, %v361
    %v376 = vpack.c.bf16 %v364, %v363
    %v377 = vpack.c.bf16 %v366, %v365
    %v378 = vpack.c.bf16 %v368, %v367
    %v379 = vpack.c.bf16 %v370, %v369
    %v380 = vpack.c.bf16 %v372, %v371
    %v389 = vunpack.c.l.b16 %v373
    %v390 = vunpack.c.h.b16 %v373
    %v391 = vunpack.c.l.b16 %v374
    %v392 = vunpack.c.h.b16 %v374
    %v393 = vunpack.c.l.b16 %v375
    %v394 = vunpack.c.h.b16 %v375
    %v395 = vunpack.c.l.b16 %v376
    %v396 = vunpack.c.h.b16 %v376
    %v397 = vunpack.c.l.b16 %v377
    %v398 = vunpack.c.h.b16 %v377
    %v399 = vunpack.c.l.b16 %v378
    %v400 = vunpack.c.h.b16 %v378
    %v401 = vunpack.c.l.b16 %v379
    %v402 = vunpack.c.h.b16 %v379
    %v403 = vunpack.c.l.b16 %v380
    %v404 = vunpack.c.h.b16 %v380
    %v405 = vpack.c.b16 %v389, %v389
    %v406 = vpack.c.b16 %v390, %v390
    %v407 = vpack.c.b16 %v391, %v391
    %v408 = vpack.c.b16 %v392, %v392
    %v409 = vpack.c.b16 %v393, %v393
    %v410 = vpack.c.b16 %v394, %v394
    %v411 = vpack.c.b16 %v395, %v395
    %v412 = vpack.c.b16 %v396, %v396
    %v413 = vpack.c.b16 %v397, %v397
    %v414 = vpack.c.b16 %v398, %v398
    %v415 = vpack.c.b16 %v399, %v399
    %v416 = vpack.c.b16 %v400, %v400
    %v417 = vpack.c.b16 %v401, %v401
    %v418 = vpack.c.b16 %v402, %v402
    %v419 = vpack.c.b16 %v403, %v403
    %v420 = vpack.c.b16 %v404, %v404
    %437 = vst [vmem:[%s2] sm:$0xf] %v405
    %438 = vst [vmem:[%s2 + $0x4] sm:$0xf] %v406
    %439 = vst [vmem:[%s2 + $0x8] sm:$0xf] %v407
    %440 = vst [vmem:[%s2 + $0xc] sm:$0xf] %v408
    %441 = vst [vmem:[%s2 + $0x10] sm:$0xf] %v409
    %442 = vst [vmem:[%s2 + $0x14] sm:$0xf] %v410
    %443 = vst [vmem:[%s2 + $0x18] sm:$0xf] %v411
    %444 = vst [vmem:[%s2 + $0x1c] sm:$0xf] %v412
    %445 = vst [vmem:[%s2 + $0x20] sm:$0xf] %v413
    %446 = vst [vmem:[%s2 + $0x24] sm:$0xf] %v414
    %447 = vst [vmem:[%s2 + $0x28] sm:$0xf] %v415
    %448 = vst [vmem:[%s2 + $0x2c] sm:$0xf] %v416
    %449 = vst [vmem:[%s2 + $0x30] sm:$0xf] %v417
    %450 = vst [vmem:[%s2 + $0x34] sm:$0xf] %v418
    %451 = vst [vmem:[%s2 + $0x38] sm:$0xf] %v419
    %452 = vst [vmem:[%s2 + $0x3c] sm:$0xf] %v420
  $region17: #{unet_innermost_forward.4} parent=0 // pred_fallthru
    _
  // Predicated region
  $region18: #{unet_innermost_forward.4} parent=0 // pred_check
    _
  $region19: #{unet_innermost_forward.4} parent=0 // pred_check_branch
    %454 = sbr.rel (0) target = $region21
  $region20: #{unet_innermost_forward.4} parent=0 // pred_region
    _
  $region21: #{unet_innermost_forward.4} parent=0 // pred_fallthru
    _
  // Predicated region
  $region22: #{unet_innermost_forward.4} parent=0 // pred_check
    _
  $region23: #{unet_innermost_forward.4} parent=0 // pred_check_branch
    %456 = sbr.rel (0) target = $region25
  $region24: #{unet_innermost_forward.4} parent=0 // pred_region
    _
  $region25: #{unet_innermost_forward.4} parent=0 // pred_fallthru
    _

// kernel: unet_innermost_forward.5
$region0: #{unet_innermost_forward.5}
  #allocation0 [shape = 'u32[]', space=smem, size = 0x4, offset = 0x4, fixed_abs, tag = 'smem constant byte address 0x4 - core index']
  #allocation1 [shape = 'u32[144,128]{1,0:T(1,128)}', space=vmem, size = 0x12000, scoped, tag = 'internal scratch']
  #allocation2 [shape = 'f32[128,128]{1,0:T(8,128)}', space=vmem, size = 0x10000, scoped, tag = 'scratch operand']
  %s0 = inlined_call_operand.vmem [shape: bf16[128,128], index: 0, kind: input, shape index: {}]
  %s1 = inlined_call_operand.vmem [shape: bf16[128,128], index: 1, kind: input, shape index: {}]
  %s2 = inlined_call_operand.vmem [shape: f32[128,128], index: 2, kind: output, shape index: {}]
  %s3 = sld [smem:[#allocation0]]
  $region26: #{unet_innermost_forward.5} parent=0
    _
  %s5 = ssub.s32 1, %s3
  %s6 = scalar_select 0, %s5, %s3
  // Predicated region
  $region2: #{unet_innermost_forward.5} parent=0 // pred_check
    _
  $region3: #{unet_innermost_forward.5} parent=0 // pred_check_branch
    %8 = sbr.rel (0) target = $region5
  $region4: #{unet_innermost_forward.5} parent=0 // pred_region
    _
  $region5: #{unet_innermost_forward.5} parent=0 // pred_fallthru
    _
  // Predicated region
  $region6: #{unet_innermost_forward.5} parent=0 // pred_check
    _
  $region7: #{unet_innermost_forward.5} parent=0 // pred_check_branch
    %10 = sbr.rel (0) target = $region9
  $region8: #{unet_innermost_forward.5} parent=0 // pred_region
    _
  $region9: #{unet_innermost_forward.5} parent=0 // pred_fallthru
    _
  %p12 = scmp.eq.s32.totalorder 0, 0
  // Predicated region
  $region10: #{unet_innermost_forward.5} parent=0 // pred_check
    %p13 = pneg %p12
  $region11: #{unet_innermost_forward.5} parent=0 // pred_check_branch
    %15 = sbr.rel (%p13) target = $region13
  $region12: #{unet_innermost_forward.5} parent=0 // pred_region
    %16 = vst [vmem:[#allocation2] sm:$0xff] 0.0
    %17 = vst [vmem:[#allocation2 + $0x8] sm:$0xff] 0.0
    %18 = vst [vmem:[#allocation2 + $0x10] sm:$0xff] 0.0
    %19 = vst [vmem:[#allocation2 + $0x18] sm:$0xff] 0.0
    %20 = vst [vmem:[#allocation2 + $0x20] sm:$0xff] 0.0
    %21 = vst [vmem:[#allocation2 + $0x28] sm:$0xff] 0.0
    %22 = vst [vmem:[#allocation2 + $0x30] sm:$0xff] 0.0
    %23 = vst [vmem:[#allocation2 + $0x38] sm:$0xff] 0.0
    %24 = vst [vmem:[#allocation2 + $0x40] sm:$0xff] 0.0
    %25 = vst [vmem:[#allocation2 + $0x48] sm:$0xff] 0.0
    %26 = vst [vmem:[#allocation2 + $0x50] sm:$0xff] 0.0
    %27 = vst [vmem:[#allocation2 + $0x58] sm:$0xff] 0.0
    %28 = vst [vmem:[#allocation2 + $0x60] sm:$0xff] 0.0
    %29 = vst [vmem:[#allocation2 + $0x68] sm:$0xff] 0.0
    %30 = vst [vmem:[#allocation2 + $0x70] sm:$0xff] 0.0
    %31 = vst [vmem:[#allocation2 + $0x78] sm:$0xff] 0.0
  $region13: #{unet_innermost_forward.5} parent=0 // pred_fallthru
    _
  %v32 = vld [vmem:[%s0] sm:$0xf]
  %v33 = vld [vmem:[%s0 + $0x4] sm:$0xf]
  %v34 = vld [vmem:[%s0 + $0x8] sm:$0xf]
  %v35 = vld [vmem:[%s0 + $0xc] sm:$0xf]
  %v36 = vld [vmem:[%s0 + $0x10] sm:$0xf]
  %v37 = vld [vmem:[%s0 + $0x14] sm:$0xf]
  %v38 = vld [vmem:[%s0 + $0x18] sm:$0xf]
  %v39 = vld [vmem:[%s0 + $0x1c] sm:$0xf]
  %v40 = vld [vmem:[%s0 + $0x20] sm:$0xf]
  %v41 = vld [vmem:[%s0 + $0x24] sm:$0xf]
  %v42 = vld [vmem:[%s0 + $0x28] sm:$0xf]
  %v43 = vld [vmem:[%s0 + $0x2c] sm:$0xf]
  %v44 = vld [vmem:[%s0 + $0x30] sm:$0xf]
  %v45 = vld [vmem:[%s0 + $0x34] sm:$0xf]
  %v46 = vld [vmem:[%s0 + $0x38] sm:$0xf]
  %v47 = vld [vmem:[%s0 + $0x3c] sm:$0xf]
  %v48 = vmax.bf16 %v32, 0
  %v49 = vmax.bf16 %v33, 0
  %v50 = vmax.bf16 %v34, 0
  %v51 = vmax.bf16 %v35, 0
  %v52 = vmax.bf16 %v36, 0
  %v53 = vmax.bf16 %v37, 0
  %v54 = vmax.bf16 %v38, 0
  %v55 = vmax.bf16 %v39, 0
  %v56 = vmax.bf16 %v40, 0
  %v57 = vmax.bf16 %v41, 0
  %v58 = vmax.bf16 %v42, 0
  %v59 = vmax.bf16 %v43, 0
  %v60 = vmax.bf16 %v44, 0
  %v61 = vmax.bf16 %v45, 0
  %v62 = vmax.bf16 %v46, 0
  %v63 = vmax.bf16 %v47, 0
  %v64 = vld [vmem:[#allocation2] sm:$0xff]
  %v65 = vld [vmem:[#allocation2 + $0x8] sm:$0xff]
  %v66 = vld [vmem:[#allocation2 + $0x10] sm:$0xff]
  %v67 = vld [vmem:[#allocation2 + $0x18] sm:$0xff]
  %v68 = vld [vmem:[#allocation2 + $0x20] sm:$0xff]
  %v69 = vld [vmem:[#allocation2 + $0x28] sm:$0xff]
  %v70 = vld [vmem:[#allocation2 + $0x30] sm:$0xff]
  %v71 = vld [vmem:[#allocation2 + $0x38] sm:$0xff]
  %v72 = vld [vmem:[#allocation2 + $0x40] sm:$0xff]
  %v73 = vld [vmem:[#allocation2 + $0x48] sm:$0xff]
  %v74 = vld [vmem:[#allocation2 + $0x50] sm:$0xff]
  %v75 = vld [vmem:[#allocation2 + $0x58] sm:$0xff]
  %v76 = vld [vmem:[#allocation2 + $0x60] sm:$0xff]
  %v77 = vld [vmem:[#allocation2 + $0x68] sm:$0xff]
  %v78 = vld [vmem:[#allocation2 + $0x70] sm:$0xff]
  %v79 = vld [vmem:[#allocation2 + $0x78] sm:$0xff]
  %v80 = vld [vmem:[%s1] sm:$0xf]
  %v81 = vld [vmem:[%s1 + $0x4] sm:$0xf]
  %v82 = vld [vmem:[%s1 + $0x8] sm:$0xf]
  %v83 = vld [vmem:[%s1 + $0xc] sm:$0xf]
  %v84 = vld [vmem:[%s1 + $0x10] sm:$0xf]
  %v85 = vld [vmem:[%s1 + $0x14] sm:$0xf]
  %v86 = vld [vmem:[%s1 + $0x18] sm:$0xf]
  %v87 = vld [vmem:[%s1 + $0x1c] sm:$0xf]
  %v88 = vld [vmem:[%s1 + $0x20] sm:$0xf]
  %v89 = vld [vmem:[%s1 + $0x24] sm:$0xf]
  %v90 = vld [vmem:[%s1 + $0x28] sm:$0xf]
  %v91 = vld [vmem:[%s1 + $0x2c] sm:$0xf]
  %v92 = vld [vmem:[%s1 + $0x30] sm:$0xf]
  %v93 = vld [vmem:[%s1 + $0x34] sm:$0xf]
  %v94 = vld [vmem:[%s1 + $0x38] sm:$0xf]
  %v95 = vld [vmem:[%s1 + $0x3c] sm:$0xf]
  %v112 = vunpack.c.l.b16 %v48
  %v113 = vunpack.c.l.b16 %v49
  %v114 = vunpack.c.l.b16 %v50
  %v115 = vunpack.c.l.b16 %v51
  %v116 = vunpack.c.l.b16 %v52
  %v117 = vunpack.c.l.b16 %v53
  %v118 = vunpack.c.l.b16 %v54
  %v119 = vunpack.c.l.b16 %v55
  %v120 = vunpack.c.l.b16 %v56
  %v121 = vunpack.c.l.b16 %v57
  %v122 = vunpack.c.l.b16 %v58
  %v123 = vunpack.c.l.b16 %v59
  %v124 = vunpack.c.l.b16 %v60
  %v125 = vunpack.c.l.b16 %v61
  %v126 = vunpack.c.l.b16 %v62
  %v127 = vunpack.c.l.b16 %v63
  %v128 = vpack.c.b16 %v113, %v112
  %v129 = vpack.c.b16 %v115, %v114
  %v130 = vpack.c.b16 %v117, %v116
  %v131 = vpack.c.b16 %v119, %v118
  %v132 = vpack.c.b16 %v121, %v120
  %v133 = vpack.c.b16 %v123, %v122
  %v134 = vpack.c.b16 %v125, %v124
  %v135 = vpack.c.b16 %v127, %v126
  %v160 = vunpack.c.l.b16 %v80
  %v161 = vunpack.c.l.b16 %v81
  %v162 = vunpack.c.l.b16 %v82
  %v163 = vunpack.c.l.b16 %v83
  %v164 = vunpack.c.l.b16 %v84
  %v165 = vunpack.c.l.b16 %v85
  %v166 = vunpack.c.l.b16 %v86
  %v167 = vunpack.c.l.b16 %v87
  %v168 = vunpack.c.l.b16 %v88
  %v169 = vunpack.c.l.b16 %v89
  %v170 = vunpack.c.l.b16 %v90
  %v171 = vunpack.c.l.b16 %v91
  %v172 = vunpack.c.l.b16 %v92
  %v173 = vunpack.c.l.b16 %v93
  %v174 = vunpack.c.l.b16 %v94
  %v175 = vunpack.c.l.b16 %v95
  %v176 = vpack.c.b16 %v161, %v160
  %v177 = vpack.c.b16 %v163, %v162
  %v178 = vpack.c.b16 %v165, %v164
  %v179 = vpack.c.b16 %v167, %v166
  %v180 = vpack.c.b16 %v169, %v168
  %v181 = vpack.c.b16 %v171, %v170
  %v182 = vpack.c.b16 %v173, %v172
  %v183 = vpack.c.b16 %v175, %v174
  %192 = vmatprep.subr.bf16.mxu0 0
  %193 = vmatpush1.bf16.msra.mxu0 %v183
  %194 = vmatprep.subr.bf16.mxu0 0
  %195 = vmatpush1.bf16.msra.mxu0 %v182
  %196 = vmatprep.subr.bf16.mxu0 0
  %197 = vmatpush1.bf16.msra.mxu0 %v181
  %198 = vmatprep.subr.bf16.mxu0 0
  %199 = vmatpush1.bf16.msra.mxu0 %v180
  %200 = vmatprep.subr.bf16.mxu0 0
  %201 = vmatpush1.bf16.msra.mxu0 %v179
  %202 = vmatprep.subr.bf16.mxu0 0
  %203 = vmatpush1.bf16.msra.mxu0 %v178
  %204 = vmatprep.subr.bf16.mxu0 0
  %205 = vmatpush1.bf16.msra.mxu0 %v177
  %206 = vmatprep.subr.bf16.mxu0 0
  %207 = vmatpush1.bf16.msra.mxu0 %v176
  %208 = vmatprep.subr.bf16.mxu0 0
  %209 = vmatpush2.bf16.msra.mxu0 0
  %210 = vmatprep.subr.bf16.mxu0 0
  %211 = vmatpush2.bf16.msra.mxu0 0
  %212 = vmatprep.subr.bf16.mxu0 0
  %213 = vmatpush2.bf16.msra.mxu0 0
  %214 = vmatprep.subr.bf16.mxu0 0
  %215 = vmatpush2.bf16.msra.mxu0 0
  %216 = vmatprep.subr.bf16.mxu0 0
  %217 = vmatpush2.bf16.msra.mxu0 0
  %218 = vmatprep.subr.bf16.mxu0 0
  %219 = vmatpush2.bf16.msra.mxu0 0
  %220 = vmatprep.subr.bf16.mxu0 0
  %221 = vmatpush2.bf16.msra.mxu0 0
  %222 = vmatprep.subr.bf16.mxu0 0
  %223 = vmatpush2.bf16.msra.mxu0 0
  %224 = vmatprep.mubr.bf16.mxu0 0
  %225 = vmatmul.mubr.bf16.gmra.mxu0 %v128
  %v226 = vpop.f32.mrf.mxu0
  %v227 = vadd.f32 0.0, %v226
  %v228 = vpop.f32.mrf.mxu0
  %v229 = vpop.f32.mrf.mxu0
  %v230 = vadd.f32 0.0, %v229
  %v231 = vpop.f32.mrf.mxu0
  %232 = vmatprep.mubr.bf16.mxu0 0
  %233 = vmatmul.mubr.bf16.gmra.mxu0 %v129
  %v234 = vpop.f32.mrf.mxu0
  %v235 = vadd.f32 0.0, %v234
  %v236 = vpop.f32.mrf.mxu0
  %v237 = vpop.f32.mrf.mxu0
  %v238 = vadd.f32 0.0, %v237
  %v239 = vpop.f32.mrf.mxu0
  %240 = vmatprep.mubr.bf16.mxu0 0
  %241 = vmatmul.mubr.bf16.gmra.mxu0 %v130
  %v242 = vpop.f32.mrf.mxu0
  %v243 = vadd.f32 0.0, %v242
  %v244 = vpop.f32.mrf.mxu0
  %v245 = vpop.f32.mrf.mxu0
  %v246 = vadd.f32 0.0, %v245
  %v247 = vpop.f32.mrf.mxu0
  %248 = vmatprep.mubr.bf16.mxu0 0
  %249 = vmatmul.mubr.bf16.gmra.mxu0 %v131
  %v250 = vpop.f32.mrf.mxu0
  %v251 = vadd.f32 0.0, %v250
  %v252 = vpop.f32.mrf.mxu0
  %v253 = vpop.f32.mrf.mxu0
  %v254 = vadd.f32 0.0, %v253
  %v255 = vpop.f32.mrf.mxu0
  %256 = vmatprep.mubr.bf16.mxu0 0
  %257 = vmatmul.mubr.bf16.gmra.mxu0 %v132
  %v258 = vpop.f32.mrf.mxu0
  %v259 = vadd.f32 0.0, %v258
  %v260 = vpop.f32.mrf.mxu0
  %v261 = vpop.f32.mrf.mxu0
  %v262 = vadd.f32 0.0, %v261
  %v263 = vpop.f32.mrf.mxu0
  %264 = vmatprep.mubr.bf16.mxu0 0
  %265 = vmatmul.mubr.bf16.gmra.mxu0 %v133
  %v266 = vpop.f32.mrf.mxu0
  %v267 = vadd.f32 0.0, %v266
  %v268 = vpop.f32.mrf.mxu0
  %v269 = vpop.f32.mrf.mxu0
  %v270 = vadd.f32 0.0, %v269
  %v271 = vpop.f32.mrf.mxu0
  %272 = vmatprep.mubr.bf16.mxu0 0
  %273 = vmatmul.mubr.bf16.gmra.mxu0 %v134
  %v274 = vpop.f32.mrf.mxu0
  %v275 = vadd.f32 0.0, %v274
  %v276 = vpop.f32.mrf.mxu0
  %v277 = vpop.f32.mrf.mxu0
  %v278 = vadd.f32 0.0, %v277
  %v279 = vpop.f32.mrf.mxu0
  %280 = vmatprep.mubr.bf16.mxu0 0
  %281 = vmatmul.mubr.bf16.gmra.mxu0 %v135
  %v282 = vpop.f32.mrf.mxu0
  %v283 = vadd.f32 0.0, %v282
  %v284 = vpop.f32.mrf.mxu0
  %v285 = vpop.f32.mrf.mxu0
  %v286 = vadd.f32 0.0, %v285
  %v287 = vpop.f32.mrf.mxu0
  %288 = vdwg.mxu0
  %v289 = vadd.f32 %v64, %v227
  %v290 = vadd.f32 %v65, %v230
  %v291 = vadd.f32 %v66, %v235
  %v292 = vadd.f32 %v67, %v238
  %v293 = vadd.f32 %v68, %v243
  %v294 = vadd.f32 %v69, %v246
  %v295 = vadd.f32 %v70, %v251
  %v296 = vadd.f32 %v71, %v254
  %v297 = vadd.f32 %v72, %v259
  %v298 = vadd.f32 %v73, %v262
  %v299 = vadd.f32 %v74, %v267
  %v300 = vadd.f32 %v75, %v270
  %v301 = vadd.f32 %v76, %v275
  %v302 = vadd.f32 %v77, %v278
  %v303 = vadd.f32 %v78, %v283
  %v304 = vadd.f32 %v79, %v286
  %305 = vst [vmem:[#allocation2] sm:$0xff] %v289
  %306 = vst [vmem:[#allocation2 + $0x8] sm:$0xff] %v290
  %307 = vst [vmem:[#allocation2 + $0x10] sm:$0xff] %v291
  %308 = vst [vmem:[#allocation2 + $0x18] sm:$0xff] %v292
  %309 = vst [vmem:[#allocation2 + $0x20] sm:$0xff] %v293
  %310 = vst [vmem:[#allocation2 + $0x28] sm:$0xff] %v294
  %311 = vst [vmem:[#allocation2 + $0x30] sm:$0xff] %v295
  %312 = vst [vmem:[#allocation2 + $0x38] sm:$0xff] %v296
  %313 = vst [vmem:[#allocation2 + $0x40] sm:$0xff] %v297
  %314 = vst [vmem:[#allocation2 + $0x48] sm:$0xff] %v298
  %315 = vst [vmem:[#allocation2 + $0x50] sm:$0xff] %v299
  %316 = vst [vmem:[#allocation2 + $0x58] sm:$0xff] %v300
  %317 = vst [vmem:[#allocation2 + $0x60] sm:$0xff] %v301
  %318 = vst [vmem:[#allocation2 + $0x68] sm:$0xff] %v302
  %319 = vst [vmem:[#allocation2 + $0x70] sm:$0xff] %v303
  %320 = vst [vmem:[#allocation2 + $0x78] sm:$0xff] %v304
  // Predicated region
  $region14: #{unet_innermost_forward.5} parent=0 // pred_check
    %p321 = pneg %p12
  $region15: #{unet_innermost_forward.5} parent=0 // pred_check_branch
    %323 = sbr.rel (%p321) target = $region17
  $region16: #{unet_innermost_forward.5} parent=0 // pred_region
    %v324 = vld [vmem:[#allocation2] sm:$0xff]
    %v325 = vld [vmem:[#allocation2 + $0x8] sm:$0xff]
    %v326 = vld [vmem:[#allocation2 + $0x10] sm:$0xff]
    %v327 = vld [vmem:[#allocation2 + $0x18] sm:$0xff]
    %v328 = vld [vmem:[#allocation2 + $0x20] sm:$0xff]
    %v329 = vld [vmem:[#allocation2 + $0x28] sm:$0xff]
    %v330 = vld [vmem:[#allocation2 + $0x30] sm:$0xff]
    %v331 = vld [vmem:[#allocation2 + $0x38] sm:$0xff]
    %v332 = vld [vmem:[#allocation2 + $0x40] sm:$0xff]
    %v333 = vld [vmem:[#allocation2 + $0x48] sm:$0xff]
    %v334 = vld [vmem:[#allocation2 + $0x50] sm:$0xff]
    %v335 = vld [vmem:[#allocation2 + $0x58] sm:$0xff]
    %v336 = vld [vmem:[#allocation2 + $0x60] sm:$0xff]
    %v337 = vld [vmem:[#allocation2 + $0x68] sm:$0xff]
    %v338 = vld [vmem:[#allocation2 + $0x70] sm:$0xff]
    %v339 = vld [vmem:[#allocation2 + $0x78] sm:$0xff]
    %340 = vst [vmem:[%s2] sm:$0xff] %v324
    %341 = vst [vmem:[%s2 + $0x8] sm:$0xff] %v325
    %342 = vst [vmem:[%s2 + $0x10] sm:$0xff] %v326
    %343 = vst [vmem:[%s2 + $0x18] sm:$0xff] %v327
    %344 = vst [vmem:[%s2 + $0x20] sm:$0xff] %v328
    %345 = vst [vmem:[%s2 + $0x28] sm:$0xff] %v329
    %346 = vst [vmem:[%s2 + $0x30] sm:$0xff] %v330
    %347 = vst [vmem:[%s2 + $0x38] sm:$0xff] %v331
    %348 = vst [vmem:[%s2 + $0x40] sm:$0xff] %v332
    %349 = vst [vmem:[%s2 + $0x48] sm:$0xff] %v333
    %350 = vst [vmem:[%s2 + $0x50] sm:$0xff] %v334
    %351 = vst [vmem:[%s2 + $0x58] sm:$0xff] %v335
    %352 = vst [vmem:[%s2 + $0x60] sm:$0xff] %v336
    %353 = vst [vmem:[%s2 + $0x68] sm:$0xff] %v337
    %354 = vst [vmem:[%s2 + $0x70] sm:$0xff] %v338
    %355 = vst [vmem:[%s2 + $0x78] sm:$0xff] %v339
  $region17: #{unet_innermost_forward.5} parent=0 // pred_fallthru
    _
  // Predicated region
  $region18: #{unet_innermost_forward.5} parent=0 // pred_check
    _
  $region19: #{unet_innermost_forward.5} parent=0 // pred_check_branch
    %357 = sbr.rel (0) target = $region21
  $region20: #{unet_innermost_forward.5} parent=0 // pred_region
    _
  $region21: #{unet_innermost_forward.5} parent=0 // pred_fallthru
    _
  // Predicated region
  $region22: #{unet_innermost_forward.5} parent=0 // pred_check
    _
  $region23: #{unet_innermost_forward.5} parent=0 // pred_check_branch
    %359 = sbr.rel (0) target = $region25
  $region24: #{unet_innermost_forward.5} parent=0 // pred_region
    _
  $region25: #{unet_innermost_forward.5} parent=0 // pred_fallthru
    _

// kernel: unet_innermost_forward.6
$region0: #{unet_innermost_forward.6}
  #allocation0 [shape = 'u32[]', space=smem, size = 0x4, offset = 0x4, fixed_abs, tag = 'smem constant byte address 0x4 - core index']
  #allocation1 [shape = 'u32[144,128]{1,0:T(1,128)}', space=vmem, size = 0x12000, scoped, tag = 'internal scratch']
  #allocation2 [shape = 'f32[1,128]{1,0:T(1,128)}', space=vmem, size = 0x200, scoped, tag = 'scratch operand']
  #allocation3 [shape = 'f32[1,128]{1,0:T(1,128)}', space=vmem, size = 0x200, scoped, tag = 'scratch operand']
  %s0 = inlined_call_operand.vmem [shape: f32[512,128], index: 0, kind: input, shape index: {}]
  %s1 = inlined_call_operand.vmem [shape: f32[2,128], index: 1, kind: output, shape index: {}]
  %s2 = sld [smem:[#allocation0]]
  $region22: #{unet_innermost_forward.6} parent=0
    _
  %s4 = ssub.s32 1, %s2
  %s5 = scalar_select 0, %s4, %s2
  // Predicated region
  $region2: #{unet_innermost_forward.6} parent=0 // pred_check
    _
  $region3: #{unet_innermost_forward.6} parent=0 // pred_check_branch
    %7 = sbr.rel (0) target = $region5
  $region4: #{unet_innermost_forward.6} parent=0 // pred_region
    _
  $region5: #{unet_innermost_forward.6} parent=0 // pred_fallthru
    _
  %p8 = scmp.eq.s32.totalorder 0, 0
  // Predicated region
  $region6: #{unet_innermost_forward.6} parent=0 // pred_check
    %p9 = pneg %p8
  $region7: #{unet_innermost_forward.6} parent=0 // pred_check_branch
    %11 = sbr.rel (%p9) target = $region9
  $region8: #{unet_innermost_forward.6} parent=0 // pred_region
    %12 = vst [vmem:[#allocation2] sm:$0x1] 0.0
    %13 = vst [vmem:[#allocation3] sm:$0x1] 0.0
  $region9: #{unet_innermost_forward.6} parent=0 // pred_fallthru
    _
  %v14 = vld [vmem:[%s0] sm:$0xff]
  %v15 = vld [vmem:[%s0 + $0x8] sm:$0xff]
  %v16 = vld [vmem:[%s0 + $0x10] sm:$0xff]
  %v17 = vld [vmem:[%s0 + $0x18] sm:$0xff]
  %v18 = vld [vmem:[%s0 + $0x20] sm:$0xff]
  %v19 = vld [vmem:[%s0 + $0x28] sm:$0xff]
  %v20 = vld [vmem:[%s0 + $0x30] sm:$0xff]
  %v21 = vld [vmem:[%s0 + $0x38] sm:$0xff]
  %v22 = vld [vmem:[%s0 + $0x40] sm:$0xff]
  %v23 = vld [vmem:[%s0 + $0x48] sm:$0xff]
  %v24 = vld [vmem:[%s0 + $0x50] sm:$0xff]
  %v25 = vld [vmem:[%s0 + $0x58] sm:$0xff]
  %v26 = vld [vmem:[%s0 + $0x60] sm:$0xff]
  %v27 = vld [vmem:[%s0 + $0x68] sm:$0xff]
  %v28 = vld [vmem:[%s0 + $0x70] sm:$0xff]
  %v29 = vld [vmem:[%s0 + $0x78] sm:$0xff]
  %v30 = vld [vmem:[%s0 + $0x80] sm:$0xff]
  %v31 = vld [vmem:[%s0 + $0x88] sm:$0xff]
  %v32 = vld [vmem:[%s0 + $0x90] sm:$0xff]
  %v33 = vld [vmem:[%s0 + $0x98] sm:$0xff]
  %v34 = vld [vmem:[%s0 + $0xa0] sm:$0xff]
  %v35 = vld [vmem:[%s0 + $0xa8] sm:$0xff]
  %v36 = vld [vmem:[%s0 + $0xb0] sm:$0xff]
  %v37 = vld [vmem:[%s0 + $0xb8] sm:$0xff]
  %v38 = vld [vmem:[%s0 + $0xc0] sm:$0xff]
  %v39 = vld [vmem:[%s0 + $0xc8] sm:$0xff]
  %v40 = vld [vmem:[%s0 + $0xd0] sm:$0xff]
  %v41 = vld [vmem:[%s0 + $0xd8] sm:$0xff]
  %v42 = vld [vmem:[%s0 + $0xe0] sm:$0xff]
  %v43 = vld [vmem:[%s0 + $0xe8] sm:$0xff]
  %v44 = vld [vmem:[%s0 + $0xf0] sm:$0xff]
  %v45 = vld [vmem:[%s0 + $0xf8] sm:$0xff]
  %v46 = vld [vmem:[%s0 + $0x100] sm:$0xff]
  %v47 = vld [vmem:[%s0 + $0x108] sm:$0xff]
  %v48 = vld [vmem:[%s0 + $0x110] sm:$0xff]
  %v49 = vld [vmem:[%s0 + $0x118] sm:$0xff]
  %v50 = vld [vmem:[%s0 + $0x120] sm:$0xff]
  %v51 = vld [vmem:[%s0 + $0x128] sm:$0xff]
  %v52 = vld [vmem:[%s0 + $0x130] sm:$0xff]
  %v53 = vld [vmem:[%s0 + $0x138] sm:$0xff]
  %v54 = vld [vmem:[%s0 + $0x140] sm:$0xff]
  %v55 = vld [vmem:[%s0 + $0x148] sm:$0xff]
  %v56 = vld [vmem:[%s0 + $0x150] sm:$0xff]
  %v57 = vld [vmem:[%s0 + $0x158] sm:$0xff]
  %v58 = vld [vmem:[%s0 + $0x160] sm:$0xff]
  %v59 = vld [vmem:[%s0 + $0x168] sm:$0xff]
  %v60 = vld [vmem:[%s0 + $0x170] sm:$0xff]
  %v61 = vld [vmem:[%s0 + $0x178] sm:$0xff]
  %v62 = vld [vmem:[%s0 + $0x180] sm:$0xff]
  %v63 = vld [vmem:[%s0 + $0x188] sm:$0xff]
  %v64 = vld [vmem:[%s0 + $0x190] sm:$0xff]
  %v65 = vld [vmem:[%s0 + $0x198] sm:$0xff]
  %v66 = vld [vmem:[%s0 + $0x1a0] sm:$0xff]
  %v67 = vld [vmem:[%s0 + $0x1a8] sm:$0xff]
  %v68 = vld [vmem:[%s0 + $0x1b0] sm:$0xff]
  %v69 = vld [vmem:[%s0 + $0x1b8] sm:$0xff]
  %v70 = vld [vmem:[%s0 + $0x1c0] sm:$0xff]
  %v71 = vld [vmem:[%s0 + $0x1c8] sm:$0xff]
  %v72 = vld [vmem:[%s0 + $0x1d0] sm:$0xff]
  %v73 = vld [vmem:[%s0 + $0x1d8] sm:$0xff]
  %v74 = vld [vmem:[%s0 + $0x1e0] sm:$0xff]
  %v75 = vld [vmem:[%s0 + $0x1e8] sm:$0xff]
  %v76 = vld [vmem:[%s0 + $0x1f0] sm:$0xff]
  %v77 = vld [vmem:[%s0 + $0x1f8] sm:$0xff]
  %v78 = vld [vmem:[#allocation2] sm:$0x1]
  %v79 = vadd.f32 %v14, %v15
  %v80 = vadd.f32 %v79, %v16
  %v81 = vadd.f32 %v80, %v17
  %v82 = vadd.f32 %v81, %v18
  %v83 = vadd.f32 %v82, %v19
  %v84 = vadd.f32 %v83, %v20
  %v85 = vadd.f32 %v84, %v21
  %v86 = vadd.f32 %v85, %v22
  %v87 = vadd.f32 %v86, %v23
  %v88 = vadd.f32 %v87, %v24
  %v89 = vadd.f32 %v88, %v25
  %v90 = vadd.f32 %v89, %v26
  %v91 = vadd.f32 %v90, %v27
  %v92 = vadd.f32 %v91, %v28
  %v93 = vadd.f32 %v92, %v29
  %v94 = vadd.f32 %v93, %v30
  %v95 = vadd.f32 %v94, %v31
  %v96 = vadd.f32 %v95, %v32
  %v97 = vadd.f32 %v96, %v33
  %v98 = vadd.f32 %v97, %v34
  %v99 = vadd.f32 %v98, %v35
  %v100 = vadd.f32 %v99, %v36
  %v101 = vadd.f32 %v100, %v37
  %v102 = vadd.f32 %v101, %v38
  %v103 = vadd.f32 %v102, %v39
  %v104 = vadd.f32 %v103, %v40
  %v105 = vadd.f32 %v104, %v41
  %v106 = vadd.f32 %v105, %v42
  %v107 = vadd.f32 %v106, %v43
  %v108 = vadd.f32 %v107, %v44
  %v109 = vadd.f32 %v108, %v45
  %v110 = vadd.f32 %v109, %v46
  %v111 = vadd.f32 %v110, %v47
  %v112 = vadd.f32 %v111, %v48
  %v113 = vadd.f32 %v112, %v49
  %v114 = vadd.f32 %v113, %v50
  %v115 = vadd.f32 %v114, %v51
  %v116 = vadd.f32 %v115, %v52
  %v117 = vadd.f32 %v116, %v53
  %v118 = vadd.f32 %v117, %v54
  %v119 = vadd.f32 %v118, %v55
  %v120 = vadd.f32 %v119, %v56
  %v121 = vadd.f32 %v120, %v57
  %v122 = vadd.f32 %v121, %v58
  %v123 = vadd.f32 %v122, %v59
  %v124 = vadd.f32 %v123, %v60
  %v125 = vadd.f32 %v124, %v61
  %v126 = vadd.f32 %v125, %v62
  %v127 = vadd.f32 %v126, %v63
  %v128 = vadd.f32 %v127, %v64
  %v129 = vadd.f32 %v128, %v65
  %v130 = vadd.f32 %v129, %v66
  %v131 = vadd.f32 %v130, %v67
  %v132 = vadd.f32 %v131, %v68
  %v133 = vadd.f32 %v132, %v69
  %v134 = vadd.f32 %v133, %v70
  %v135 = vadd.f32 %v134, %v71
  %v136 = vadd.f32 %v135, %v72
  %v137 = vadd.f32 %v136, %v73
  %v138 = vadd.f32 %v137, %v74
  %v139 = vadd.f32 %v138, %v75
  %v140 = vadd.f32 %v139, %v76
  %v141 = vadd.f32 %v140, %v77
  %v142 = vrot.slane %v141, 4
  %v143 = vadd.f32 %v141, %v142
  %v144 = vrot.slane %v143, 2
  %v145 = vadd.f32 %v143, %v144
  %v146 = vrot.slane %v145, 1
  %v147 = vadd.f32 %v145, %v146
  %v148 = vadd.f32 %v78, %v147
  %149 = vst [vmem:[#allocation2] sm:$0x1] %v148
  %v150 = vld [vmem:[#allocation3] sm:$0x1]
  %v151 = vmul.f32 %v14, %v14
  %v152 = vmul.f32 %v15, %v15
  %v153 = vmul.f32 %v16, %v16
  %v154 = vmul.f32 %v17, %v17
  %v155 = vmul.f32 %v18, %v18
  %v156 = vmul.f32 %v19, %v19
  %v157 = vmul.f32 %v20, %v20
  %v158 = vmul.f32 %v21, %v21
  %v159 = vmul.f32 %v22, %v22
  %v160 = vmul.f32 %v23, %v23
  %v161 = vmul.f32 %v24, %v24
  %v162 = vmul.f32 %v25, %v25
  %v163 = vmul.f32 %v26, %v26
  %v164 = vmul.f32 %v27, %v27
  %v165 = vmul.f32 %v28, %v28
  %v166 = vmul.f32 %v29, %v29
  %v167 = vmul.f32 %v30, %v30
  %v168 = vmul.f32 %v31, %v31
  %v169 = vmul.f32 %v32, %v32
  %v170 = vmul.f32 %v33, %v33
  %v171 = vmul.f32 %v34, %v34
  %v172 = vmul.f32 %v35, %v35
  %v173 = vmul.f32 %v36, %v36
  %v174 = vmul.f32 %v37, %v37
  %v175 = vmul.f32 %v38, %v38
  %v176 = vmul.f32 %v39, %v39
  %v177 = vmul.f32 %v40, %v40
  %v178 = vmul.f32 %v41, %v41
  %v179 = vmul.f32 %v42, %v42
  %v180 = vmul.f32 %v43, %v43
  %v181 = vmul.f32 %v44, %v44
  %v182 = vmul.f32 %v45, %v45
  %v183 = vmul.f32 %v46, %v46
  %v184 = vmul.f32 %v47, %v47
  %v185 = vmul.f32 %v48, %v48
  %v186 = vmul.f32 %v49, %v49
  %v187 = vmul.f32 %v50, %v50
  %v188 = vmul.f32 %v51, %v51
  %v189 = vmul.f32 %v52, %v52
  %v190 = vmul.f32 %v53, %v53
  %v191 = vmul.f32 %v54, %v54
  %v192 = vmul.f32 %v55, %v55
  %v193 = vmul.f32 %v56, %v56
  %v194 = vmul.f32 %v57, %v57
  %v195 = vmul.f32 %v58, %v58
  %v196 = vmul.f32 %v59, %v59
  %v197 = vmul.f32 %v60, %v60
  %v198 = vmul.f32 %v61, %v61
  %v199 = vmul.f32 %v62, %v62
  %v200 = vmul.f32 %v63, %v63
  %v201 = vmul.f32 %v64, %v64
  %v202 = vmul.f32 %v65, %v65
  %v203 = vmul.f32 %v66, %v66
  %v204 = vmul.f32 %v67, %v67
  %v205 = vmul.f32 %v68, %v68
  %v206 = vmul.f32 %v69, %v69
  %v207 = vmul.f32 %v70, %v70
  %v208 = vmul.f32 %v71, %v71
  %v209 = vmul.f32 %v72, %v72
  %v210 = vmul.f32 %v73, %v73
  %v211 = vmul.f32 %v74, %v74
  %v212 = vmul.f32 %v75, %v75
  %v213 = vmul.f32 %v76, %v76
  %v214 = vmul.f32 %v77, %v77
  %v215 = vadd.f32 %v151, %v152
  %v216 = vadd.f32 %v215, %v153
  %v217 = vadd.f32 %v216, %v154
  %v218 = vadd.f32 %v217, %v155
  %v219 = vadd.f32 %v218, %v156
  %v220 = vadd.f32 %v219, %v157
  %v221 = vadd.f32 %v220, %v158
  %v222 = vadd.f32 %v221, %v159
  %v223 = vadd.f32 %v222, %v160
  %v224 = vadd.f32 %v223, %v161
  %v225 = vadd.f32 %v224, %v162
  %v226 = vadd.f32 %v225, %v163
  %v227 = vadd.f32 %v226, %v164
  %v228 = vadd.f32 %v227, %v165
  %v229 = vadd.f32 %v228, %v166
  %v230 = vadd.f32 %v229, %v167
  %v231 = vadd.f32 %v230, %v168
  %v232 = vadd.f32 %v231, %v169
  %v233 = vadd.f32 %v232, %v170
  %v234 = vadd.f32 %v233, %v171
  %v235 = vadd.f32 %v234, %v172
  %v236 = vadd.f32 %v235, %v173
  %v237 = vadd.f32 %v236, %v174
  %v238 = vadd.f32 %v237, %v175
  %v239 = vadd.f32 %v238, %v176
  %v240 = vadd.f32 %v239, %v177
  %v241 = vadd.f32 %v240, %v178
  %v242 = vadd.f32 %v241, %v179
  %v243 = vadd.f32 %v242, %v180
  %v244 = vadd.f32 %v243, %v181
  %v245 = vadd.f32 %v244, %v182
  %v246 = vadd.f32 %v245, %v183
  %v247 = vadd.f32 %v246, %v184
  %v248 = vadd.f32 %v247, %v185
  %v249 = vadd.f32 %v248, %v186
  %v250 = vadd.f32 %v249, %v187
  %v251 = vadd.f32 %v250, %v188
  %v252 = vadd.f32 %v251, %v189
  %v253 = vadd.f32 %v252, %v190
  %v254 = vadd.f32 %v253, %v191
  %v255 = vadd.f32 %v254, %v192
  %v256 = vadd.f32 %v255, %v193
  %v257 = vadd.f32 %v256, %v194
  %v258 = vadd.f32 %v257, %v195
  %v259 = vadd.f32 %v258, %v196
  %v260 = vadd.f32 %v259, %v197
  %v261 = vadd.f32 %v260, %v198
  %v262 = vadd.f32 %v261, %v199
  %v263 = vadd.f32 %v262, %v200
  %v264 = vadd.f32 %v263, %v201
  %v265 = vadd.f32 %v264, %v202
  %v266 = vadd.f32 %v265, %v203
  %v267 = vadd.f32 %v266, %v204
  %v268 = vadd.f32 %v267, %v205
  %v269 = vadd.f32 %v268, %v206
  %v270 = vadd.f32 %v269, %v207
  %v271 = vadd.f32 %v270, %v208
  %v272 = vadd.f32 %v271, %v209
  %v273 = vadd.f32 %v272, %v210
  %v274 = vadd.f32 %v273, %v211
  %v275 = vadd.f32 %v274, %v212
  %v276 = vadd.f32 %v275, %v213
  %v277 = vadd.f32 %v276, %v214
  %v278 = vrot.slane %v277, 4
  %v279 = vadd.f32 %v277, %v278
  %v280 = vrot.slane %v279, 2
  %v281 = vadd.f32 %v279, %v280
  %v282 = vrot.slane %v281, 1
  %v283 = vadd.f32 %v281, %v282
  %v284 = vadd.f32 %v150, %v283
  %285 = vst [vmem:[#allocation3] sm:$0x1] %v284
  // Predicated region
  $region10: #{unet_innermost_forward.6} parent=0 // pred_check
    %p286 = pneg %p8
  $region11: #{unet_innermost_forward.6} parent=0 // pred_check_branch
    %288 = sbr.rel (%p286) target = $region13
  $region12: #{unet_innermost_forward.6} parent=0 // pred_region
    %v289 = vld [vmem:[#allocation2] sm:$0x1]
    %290 = vst [vmem:[%s1] sm:$0x1] %v289
    %v291 = vld [vmem:[#allocation3] sm:$0x1]
    %292 = vst [vmem:[%s1 + $0x1] sm:$0x1] %v291
  $region13: #{unet_innermost_forward.6} parent=0 // pred_fallthru
    _
  // Predicated region
  $region14: #{unet_innermost_forward.6} parent=0 // pred_check
    _
  $region15: #{unet_innermost_forward.6} parent=0 // pred_check_branch
    %294 = sbr.rel (0) target = $region17
  $region16: #{unet_innermost_forward.6} parent=0 // pred_region
    _
  $region17: #{unet_innermost_forward.6} parent=0 // pred_fallthru
    _
  // Predicated region
  $region18: #{unet_innermost_forward.6} parent=0 // pred_check
    _
  $region19: #{unet_innermost_forward.6} parent=0 // pred_check_branch
    %296 = sbr.rel (0) target = $region21
  $region20: #{unet_innermost_forward.6} parent=0 // pred_region
    _
  $region21: #{unet_innermost_forward.6} parent=0 // pred_fallthru
    _

// kernel: unet_innermost_forward.7
$region0: #{unet_innermost_forward.7}
  #allocation0 [shape = 'u32[]', space=smem, size = 0x4, offset = 0x4, fixed_abs, tag = 'smem constant byte address 0x4 - core index']
  #allocation1 [shape = 'u32[144,128]{1,0:T(1,128)}', space=vmem, size = 0x12000, scoped, tag = 'internal scratch']
  %s0 = inlined_call_operand.vmem [shape: f32[512,128], index: 0, kind: input, shape index: {}]
  %s1 = inlined_call_operand.vmem [shape: f32[2,128], index: 1, kind: input, shape index: {}]
  %s2 = inlined_call_operand.vmem [shape: f32[1,128], index: 2, kind: input, shape index: {}]
  %s3 = inlined_call_operand.vmem [shape: f32[1,128], index: 3, kind: input, shape index: {}]
  %s4 = inlined_call_operand.vmem [shape: f32[512,128], index: 4, kind: output, shape index: {}]
  %s5 = sld [smem:[#allocation0]]
  $region26: #{unet_innermost_forward.7} parent=0
    _
  %s7 = ssub.s32 1, %s5
  %s8 = scalar_select 0, %s7, %s5
  // Predicated region
  $region2: #{unet_innermost_forward.7} parent=0 // pred_check
    _
  $region3: #{unet_innermost_forward.7} parent=0 // pred_check_branch
    %10 = sbr.rel (0) target = $region5
  $region4: #{unet_innermost_forward.7} parent=0 // pred_region
    _
  $region5: #{unet_innermost_forward.7} parent=0 // pred_fallthru
    _
  // Predicated region
  $region6: #{unet_innermost_forward.7} parent=0 // pred_check
    _
  $region7: #{unet_innermost_forward.7} parent=0 // pred_check_branch
    %12 = sbr.rel (0) target = $region9
  $region8: #{unet_innermost_forward.7} parent=0 // pred_region
    _
  $region9: #{unet_innermost_forward.7} parent=0 // pred_fallthru
    _
  // Predicated region
  $region10: #{unet_innermost_forward.7} parent=0 // pred_check
    _
  $region11: #{unet_innermost_forward.7} parent=0 // pred_check_branch
    %14 = sbr.rel (0) target = $region13
  $region12: #{unet_innermost_forward.7} parent=0 // pred_region
    _
  $region13: #{unet_innermost_forward.7} parent=0 // pred_fallthru
    _
  // Predicated region
  $region14: #{unet_innermost_forward.7} parent=0 // pred_check
    _
  $region15: #{unet_innermost_forward.7} parent=0 // pred_check_branch
    %16 = sbr.rel (0) target = $region17
  $region16: #{unet_innermost_forward.7} parent=0 // pred_region
    _
  $region17: #{unet_innermost_forward.7} parent=0 // pred_fallthru
    _
  %v17 = vld [vmem:[%s1] sm:$0x1]
  %v18 = vmul.f32 %v17, 0.001953125
  %v19 = vld [vmem:[%s1 + $0x1] sm:$0x1]
  %v20 = vmul.f32 %v19, 0.001953125
  %v21 = vmul.f32 %v18, %v18
  %v22 = vsub.f32 %v20, %v21
  %v23 = vld [vmem:[%s2] sm:$0x1]
  %v24 = vadd.f32 %v22, 1e-05
  %v25 = vrsqrt.pop %v24
  %v26 = vmul.f32 %v23, %v25
  %v27 = vld [vmem:[%s3] sm:$0x1]
  %v28 = vmul.f32 %v18, %v26
  %v29 = vsub.f32 %v27, %v28
  %v30 = vld [vmem:[%s0] sm:$0xff]
  %v31 = vld [vmem:[%s0 + $0x8] sm:$0xff]
  %v32 = vld [vmem:[%s0 + $0x10] sm:$0xff]
  %v33 = vld [vmem:[%s0 + $0x18] sm:$0xff]
  %v34 = vld [vmem:[%s0 + $0x20] sm:$0xff]
  %v35 = vld [vmem:[%s0 + $0x28] sm:$0xff]
  %v36 = vld [vmem:[%s0 + $0x30] sm:$0xff]
  %v37 = vld [vmem:[%s0 + $0x38] sm:$0xff]
  %v38 = vld [vmem:[%s0 + $0x40] sm:$0xff]
  %v39 = vld [vmem:[%s0 + $0x48] sm:$0xff]
  %v40 = vld [vmem:[%s0 + $0x50] sm:$0xff]
  %v41 = vld [vmem:[%s0 + $0x58] sm:$0xff]
  %v42 = vld [vmem:[%s0 + $0x60] sm:$0xff]
  %v43 = vld [vmem:[%s0 + $0x68] sm:$0xff]
  %v44 = vld [vmem:[%s0 + $0x70] sm:$0xff]
  %v45 = vld [vmem:[%s0 + $0x78] sm:$0xff]
  %v46 = vld [vmem:[%s0 + $0x80] sm:$0xff]
  %v47 = vld [vmem:[%s0 + $0x88] sm:$0xff]
  %v48 = vld [vmem:[%s0 + $0x90] sm:$0xff]
  %v49 = vld [vmem:[%s0 + $0x98] sm:$0xff]
  %v50 = vld [vmem:[%s0 + $0xa0] sm:$0xff]
  %v51 = vld [vmem:[%s0 + $0xa8] sm:$0xff]
  %v52 = vld [vmem:[%s0 + $0xb0] sm:$0xff]
  %v53 = vld [vmem:[%s0 + $0xb8] sm:$0xff]
  %v54 = vld [vmem:[%s0 + $0xc0] sm:$0xff]
  %v55 = vld [vmem:[%s0 + $0xc8] sm:$0xff]
  %v56 = vld [vmem:[%s0 + $0xd0] sm:$0xff]
  %v57 = vld [vmem:[%s0 + $0xd8] sm:$0xff]
  %v58 = vld [vmem:[%s0 + $0xe0] sm:$0xff]
  %v59 = vld [vmem:[%s0 + $0xe8] sm:$0xff]
  %v60 = vld [vmem:[%s0 + $0xf0] sm:$0xff]
  %v61 = vld [vmem:[%s0 + $0xf8] sm:$0xff]
  %v62 = vld [vmem:[%s0 + $0x100] sm:$0xff]
  %v63 = vld [vmem:[%s0 + $0x108] sm:$0xff]
  %v64 = vld [vmem:[%s0 + $0x110] sm:$0xff]
  %v65 = vld [vmem:[%s0 + $0x118] sm:$0xff]
  %v66 = vld [vmem:[%s0 + $0x120] sm:$0xff]
  %v67 = vld [vmem:[%s0 + $0x128] sm:$0xff]
  %v68 = vld [vmem:[%s0 + $0x130] sm:$0xff]
  %v69 = vld [vmem:[%s0 + $0x138] sm:$0xff]
  %v70 = vld [vmem:[%s0 + $0x140] sm:$0xff]
  %v71 = vld [vmem:[%s0 + $0x148] sm:$0xff]
  %v72 = vld [vmem:[%s0 + $0x150] sm:$0xff]
  %v73 = vld [vmem:[%s0 + $0x158] sm:$0xff]
  %v74 = vld [vmem:[%s0 + $0x160] sm:$0xff]
  %v75 = vld [vmem:[%s0 + $0x168] sm:$0xff]
  %v76 = vld [vmem:[%s0 + $0x170] sm:$0xff]
  %v77 = vld [vmem:[%s0 + $0x178] sm:$0xff]
  %v78 = vld [vmem:[%s0 + $0x180] sm:$0xff]
  %v79 = vld [vmem:[%s0 + $0x188] sm:$0xff]
  %v80 = vld [vmem:[%s0 + $0x190] sm:$0xff]
  %v81 = vld [vmem:[%s0 + $0x198] sm:$0xff]
  %v82 = vld [vmem:[%s0 + $0x1a0] sm:$0xff]
  %v83 = vld [vmem:[%s0 + $0x1a8] sm:$0xff]
  %v84 = vld [vmem:[%s0 + $0x1b0] sm:$0xff]
  %v85 = vld [vmem:[%s0 + $0x1b8] sm:$0xff]
  %v86 = vld [vmem:[%s0 + $0x1c0] sm:$0xff]
  %v87 = vld [vmem:[%s0 + $0x1c8] sm:$0xff]
  %v88 = vld [vmem:[%s0 + $0x1d0] sm:$0xff]
  %v89 = vld [vmem:[%s0 + $0x1d8] sm:$0xff]
  %v90 = vld [vmem:[%s0 + $0x1e0] sm:$0xff]
  %v91 = vld [vmem:[%s0 + $0x1e8] sm:$0xff]
  %v92 = vld [vmem:[%s0 + $0x1f0] sm:$0xff]
  %v93 = vld [vmem:[%s0 + $0x1f8] sm:$0xff]
  %v95 = vlaneseq
  %v96 = vshrl.u32 %v95, 7
  %v97 = vsub.s32 0, %v96
  %v98 = vrot.slane %v26, %v97
  %v100 = vmul.f32 %v30, %v98
  %v101 = vmul.f32 %v31, %v98
  %v102 = vmul.f32 %v32, %v98
  %v103 = vmul.f32 %v33, %v98
  %v104 = vmul.f32 %v34, %v98
  %v105 = vmul.f32 %v35, %v98
  %v106 = vmul.f32 %v36, %v98
  %v107 = vmul.f32 %v37, %v98
  %v108 = vmul.f32 %v38, %v98
  %v109 = vmul.f32 %v39, %v98
  %v110 = vmul.f32 %v40, %v98
  %v111 = vmul.f32 %v41, %v98
  %v112 = vmul.f32 %v42, %v98
  %v113 = vmul.f32 %v43, %v98
  %v114 = vmul.f32 %v44, %v98
  %v115 = vmul.f32 %v45, %v98
  %v116 = vmul.f32 %v46, %v98
  %v117 = vmul.f32 %v47, %v98
  %v118 = vmul.f32 %v48, %v98
  %v119 = vmul.f32 %v49, %v98
  %v120 = vmul.f32 %v50, %v98
  %v121 = vmul.f32 %v51, %v98
  %v122 = vmul.f32 %v52, %v98
  %v123 = vmul.f32 %v53, %v98
  %v124 = vmul.f32 %v54, %v98
  %v125 = vmul.f32 %v55, %v98
  %v126 = vmul.f32 %v56, %v98
  %v127 = vmul.f32 %v57, %v98
  %v128 = vmul.f32 %v58, %v98
  %v129 = vmul.f32 %v59, %v98
  %v130 = vmul.f32 %v60, %v98
  %v131 = vmul.f32 %v61, %v98
  %v132 = vmul.f32 %v62, %v98
  %v133 = vmul.f32 %v63, %v98
  %v134 = vmul.f32 %v64, %v98
  %v135 = vmul.f32 %v65, %v98
  %v136 = vmul.f32 %v66, %v98
  %v137 = vmul.f32 %v67, %v98
  %v138 = vmul.f32 %v68, %v98
  %v139 = vmul.f32 %v69, %v98
  %v140 = vmul.f32 %v70, %v98
  %v141 = vmul.f32 %v71, %v98
  %v142 = vmul.f32 %v72, %v98
  %v143 = vmul.f32 %v73, %v98
  %v144 = vmul.f32 %v74, %v98
  %v145 = vmul.f32 %v75, %v98
  %v146 = vmul.f32 %v76, %v98
  %v147 = vmul.f32 %v77, %v98
  %v148 = vmul.f32 %v78, %v98
  %v149 = vmul.f32 %v79, %v98
  %v150 = vmul.f32 %v80, %v98
  %v151 = vmul.f32 %v81, %v98
  %v152 = vmul.f32 %v82, %v98
  %v153 = vmul.f32 %v83, %v98
  %v154 = vmul.f32 %v84, %v98
  %v155 = vmul.f32 %v85, %v98
  %v156 = vmul.f32 %v86, %v98
  %v157 = vmul.f32 %v87, %v98
  %v158 = vmul.f32 %v88, %v98
  %v159 = vmul.f32 %v89, %v98
  %v160 = vmul.f32 %v90, %v98
  %v161 = vmul.f32 %v91, %v98
  %v162 = vmul.f32 %v92, %v98
  %v163 = vmul.f32 %v93, %v98
  %v165 = vlaneseq
  %v166 = vshrl.u32 %v165, 7
  %v167 = vsub.s32 0, %v166
  %v168 = vrot.slane %v29, %v167
  %v170 = vadd.f32 %v100, %v168
  %v171 = vadd.f32 %v101, %v168
  %v172 = vadd.f32 %v102, %v168
  %v173 = vadd.f32 %v103, %v168
  %v174 = vadd.f32 %v104, %v168
  %v175 = vadd.f32 %v105, %v168
  %v176 = vadd.f32 %v106, %v168
  %v177 = vadd.f32 %v107, %v168
  %v178 = vadd.f32 %v108, %v168
  %v179 = vadd.f32 %v109, %v168
  %v180 = vadd.f32 %v110, %v168
  %v181 = vadd.f32 %v111, %v168
  %v182 = vadd.f32 %v112, %v168
  %v183 = vadd.f32 %v113, %v168
  %v184 = vadd.f32 %v114, %v168
  %v185 = vadd.f32 %v115, %v168
  %v186 = vadd.f32 %v116, %v168
  %v187 = vadd.f32 %v117, %v168
  %v188 = vadd.f32 %v118, %v168
  %v189 = vadd.f32 %v119, %v168
  %v190 = vadd.f32 %v120, %v168
  %v191 = vadd.f32 %v121, %v168
  %v192 = vadd.f32 %v122, %v168
  %v193 = vadd.f32 %v123, %v168
  %v194 = vadd.f32 %v124, %v168
  %v195 = vadd.f32 %v125, %v168
  %v196 = vadd.f32 %v126, %v168
  %v197 = vadd.f32 %v127, %v168
  %v198 = vadd.f32 %v128, %v168
  %v199 = vadd.f32 %v129, %v168
  %v200 = vadd.f32 %v130, %v168
  %v201 = vadd.f32 %v131, %v168
  %v202 = vadd.f32 %v132, %v168
  %v203 = vadd.f32 %v133, %v168
  %v204 = vadd.f32 %v134, %v168
  %v205 = vadd.f32 %v135, %v168
  %v206 = vadd.f32 %v136, %v168
  %v207 = vadd.f32 %v137, %v168
  %v208 = vadd.f32 %v138, %v168
  %v209 = vadd.f32 %v139, %v168
  %v210 = vadd.f32 %v140, %v168
  %v211 = vadd.f32 %v141, %v168
  %v212 = vadd.f32 %v142, %v168
  %v213 = vadd.f32 %v143, %v168
  %v214 = vadd.f32 %v144, %v168
  %v215 = vadd.f32 %v145, %v168
  %v216 = vadd.f32 %v146, %v168
  %v217 = vadd.f32 %v147, %v168
  %v218 = vadd.f32 %v148, %v168
  %v219 = vadd.f32 %v149, %v168
  %v220 = vadd.f32 %v150, %v168
  %v221 = vadd.f32 %v151, %v168
  %v222 = vadd.f32 %v152, %v168
  %v223 = vadd.f32 %v153, %v168
  %v224 = vadd.f32 %v154, %v168
  %v225 = vadd.f32 %v155, %v168
  %v226 = vadd.f32 %v156, %v168
  %v227 = vadd.f32 %v157, %v168
  %v228 = vadd.f32 %v158, %v168
  %v229 = vadd.f32 %v159, %v168
  %v230 = vadd.f32 %v160, %v168
  %v231 = vadd.f32 %v161, %v168
  %v232 = vadd.f32 %v162, %v168
  %v233 = vadd.f32 %v163, %v168
  %234 = vst [vmem:[%s4] sm:$0xff] %v170
  %235 = vst [vmem:[%s4 + $0x8] sm:$0xff] %v171
  %236 = vst [vmem:[%s4 + $0x10] sm:$0xff] %v172
  %237 = vst [vmem:[%s4 + $0x18] sm:$0xff] %v173
  %238 = vst [vmem:[%s4 + $0x20] sm:$0xff] %v174
  %239 = vst [vmem:[%s4 + $0x28] sm:$0xff] %v175
  %240 = vst [vmem:[%s4 + $0x30] sm:$0xff] %v176
  %241 = vst [vmem:[%s4 + $0x38] sm:$0xff] %v177
  %242 = vst [vmem:[%s4 + $0x40] sm:$0xff] %v178
  %243 = vst [vmem:[%s4 + $0x48] sm:$0xff] %v179
  %244 = vst [vmem:[%s4 + $0x50] sm:$0xff] %v180
  %245 = vst [vmem:[%s4 + $0x58] sm:$0xff] %v181
  %246 = vst [vmem:[%s4 + $0x60] sm:$0xff] %v182
  %247 = vst [vmem:[%s4 + $0x68] sm:$0xff] %v183
  %248 = vst [vmem:[%s4 + $0x70] sm:$0xff] %v184
  %249 = vst [vmem:[%s4 + $0x78] sm:$0xff] %v185
  %250 = vst [vmem:[%s4 + $0x80] sm:$0xff] %v186
  %251 = vst [vmem:[%s4 + $0x88] sm:$0xff] %v187
  %252 = vst [vmem:[%s4 + $0x90] sm:$0xff] %v188
  %253 = vst [vmem:[%s4 + $0x98] sm:$0xff] %v189
  %254 = vst [vmem:[%s4 + $0xa0] sm:$0xff] %v190
  %255 = vst [vmem:[%s4 + $0xa8] sm:$0xff] %v191
  %256 = vst [vmem:[%s4 + $0xb0] sm:$0xff] %v192
  %257 = vst [vmem:[%s4 + $0xb8] sm:$0xff] %v193
  %258 = vst [vmem:[%s4 + $0xc0] sm:$0xff] %v194
  %259 = vst [vmem:[%s4 + $0xc8] sm:$0xff] %v195
  %260 = vst [vmem:[%s4 + $0xd0] sm:$0xff] %v196
  %261 = vst [vmem:[%s4 + $0xd8] sm:$0xff] %v197
  %262 = vst [vmem:[%s4 + $0xe0] sm:$0xff] %v198
  %263 = vst [vmem:[%s4 + $0xe8] sm:$0xff] %v199
  %264 = vst [vmem:[%s4 + $0xf0] sm:$0xff] %v200
  %265 = vst [vmem:[%s4 + $0xf8] sm:$0xff] %v201
  %266 = vst [vmem:[%s4 + $0x100] sm:$0xff] %v202
  %267 = vst [vmem:[%s4 + $0x108] sm:$0xff] %v203
  %268 = vst [vmem:[%s4 + $0x110] sm:$0xff] %v204
  %269 = vst [vmem:[%s4 + $0x118] sm:$0xff] %v205
  %270 = vst [vmem:[%s4 + $0x120] sm:$0xff] %v206
  %271 = vst [vmem:[%s4 + $0x128] sm:$0xff] %v207
  %272 = vst [vmem:[%s4 + $0x130] sm:$0xff] %v208
  %273 = vst [vmem:[%s4 + $0x138] sm:$0xff] %v209
  %274 = vst [vmem:[%s4 + $0x140] sm:$0xff] %v210
  %275 = vst [vmem:[%s4 + $0x148] sm:$0xff] %v211
  %276 = vst [vmem:[%s4 + $0x150] sm:$0xff] %v212
  %277 = vst [vmem:[%s4 + $0x158] sm:$0xff] %v213
  %278 = vst [vmem:[%s4 + $0x160] sm:$0xff] %v214
  %279 = vst [vmem:[%s4 + $0x168] sm:$0xff] %v215
  %280 = vst [vmem:[%s4 + $0x170] sm:$0xff] %v216
  %281 = vst [vmem:[%s4 + $0x178] sm:$0xff] %v217
  %282 = vst [vmem:[%s4 + $0x180] sm:$0xff] %v218
  %283 = vst [vmem:[%s4 + $0x188] sm:$0xff] %v219
  %284 = vst [vmem:[%s4 + $0x190] sm:$0xff] %v220
  %285 = vst [vmem:[%s4 + $0x198] sm:$0xff] %v221
  %286 = vst [vmem:[%s4 + $0x1a0] sm:$0xff] %v222
  %287 = vst [vmem:[%s4 + $0x1a8] sm:$0xff] %v223
  %288 = vst [vmem:[%s4 + $0x1b0] sm:$0xff] %v224
  %289 = vst [vmem:[%s4 + $0x1b8] sm:$0xff] %v225
  %290 = vst [vmem:[%s4 + $0x1c0] sm:$0xff] %v226
  %291 = vst [vmem:[%s4 + $0x1c8] sm:$0xff] %v227
  %292 = vst [vmem:[%s4 + $0x1d0] sm:$0xff] %v228
  %293 = vst [vmem:[%s4 + $0x1d8] sm:$0xff] %v229
  %294 = vst [vmem:[%s4 + $0x1e0] sm:$0xff] %v230
  %295 = vst [vmem:[%s4 + $0x1e8] sm:$0xff] %v231
  %296 = vst [vmem:[%s4 + $0x1f0] sm:$0xff] %v232
  %297 = vst [vmem:[%s4 + $0x1f8] sm:$0xff] %v233
  // Predicated region
  $region18: #{unet_innermost_forward.7} parent=0 // pred_check
    _
  $region19: #{unet_innermost_forward.7} parent=0 // pred_check_branch
    %299 = sbr.rel (0) target = $region21
  $region20: #{unet_innermost_forward.7} parent=0 // pred_region
    _
  $region21: #{unet_innermost_forward.7} parent=0 // pred_fallthru
    _
  // Predicated region
  $region22: #{unet_innermost_forward.7} parent=0 // pred_check
    _
  $region23: #{unet_innermost_forward.7} parent=0 // pred_check_branch
    %301 = sbr.rel (0) target = $region25
  $region24: #{unet_innermost_forward.7} parent=0 // pred_region
    _
  $region25: #{unet_innermost_forward.7} parent=0 // pred_fallthru
    _

</llo_original>
